<compile_context>
chip_gen: v7x
topology: tpu7x:2x2x1
jax: 0.10.0
libtpu: 0.0.40
codegen_flags: <defaults>
</compile_context>

<pallas_src>
import functools

import jax
import jax.numpy as jnp
import numpy as np
from jax.experimental import pallas as pl
from jax.experimental.pallas import tpu as pltpu


def recurrent_net_kernel(x_ref,       # (T*B, D)   time-major, flattened
                         wih0_ref,    # (D, 4H)    layer-0 input weights (pre-transposed)
                         b0_ref,      # (1, 4H)    b_ih0 + b_hh0
                         whhbd_ref,   # (2H, 8H)   block-diag [W_hh0 | 0 ; 0 | W_hh1]
                         wih1_ref,    # (H, 4H)    layer-1 input weights (pre-transposed)
                         b1_ref,      # (1, 4H)    b_ih1 + b_hh1
                         wcls_ref,    # (H, CPAD)  classifier weights, zero-padded lanes
                         bcls_ref,    # (1, CPAD)
                         out_ref,     # (B, CPAD)
                         *, seq_len):
    T = seq_len
    TB, _ = x_ref.shape
    B = TB // T
    H = wih1_ref.shape[0]

    # ---- hoisted out of the time loop -------------------------------------
    # Layer-0 input projection for all timesteps in one matmul, bias folded.
    xproj = (jnp.dot(x_ref[...], wih0_ref[...],
                     preferred_element_type=jnp.float32)
             + b0_ref[...]).reshape(T, B, 4 * H)          # (T, B, 4H)

    whh_bd = whhbd_ref[...]                               # (2H, 8H)
    wih1 = wih1_ref[...]                                  # (H, 4H)
    b1b = jnp.broadcast_to(b1_ref[...], (B, 4 * H))       # hoisted broadcast

    def cell(gates, c):
        # Whole-vreg nonlinearities (2 EUP pushes), slice afterwards.
        sg = jax.nn.sigmoid(gates)
        th = jnp.tanh(gates)
        i = sg[:, 0 * H:1 * H]
        f = sg[:, 1 * H:2 * H]
        g = th[:, 2 * H:3 * H]
        o = sg[:, 3 * H:4 * H]
        c_new = f * c + i * g
        h_new = o * jnp.tanh(c_new)
        return h_new, c_new

    zeros_h = jnp.zeros((B, H), jnp.float32)

    # t = 0: initial h/c are zero -> recurrent projections vanish.
    h0, c0 = cell(xproj[0], zeros_h)
    g1 = jnp.dot(h0, wih1, preferred_element_type=jnp.float32) + b1b
    h1, c1 = cell(g1, zeros_h)

    # Remaining steps; T is small & static, so unroll for the LLO scheduler.
    for t in range(1, T):
        h01 = jnp.concatenate([h0, h1], axis=-1)          # (B, 2H)
        # Both layers' recurrent projections in one 256-wide MXU pass.
        hh = jnp.dot(h01, whh_bd, preferred_element_type=jnp.float32)  # (B, 8H)
        h0, c0 = cell(xproj[t] + hh[:, :4 * H], c0)
        g1 = (jnp.dot(h0, wih1, preferred_element_type=jnp.float32)
              + hh[:, 4 * H:] + b1b)
        h1, c1 = cell(g1, c1)

    logits = (jnp.dot(h1, wcls_ref[...], preferred_element_type=jnp.float32)
              + bcls_ref[...])
    out_ref[...] = logits.astype(out_ref.dtype)           # unmasked (B, 128) store


def prepare_kernel_params(raw, num_classes):
    """Repack PyTorch-shaped LSTM/Linear params into the kernel layout."""
    H = raw["whh0"].shape[1]
    cpad = ((num_classes + 127) // 128) * 128

    whh_bd = jnp.zeros((2 * H, 8 * H), jnp.float32)
    whh_bd = whh_bd.at[:H, :4 * H].set(raw["whh0"].T)
    whh_bd = whh_bd.at[H:, 4 * H:].set(raw["whh1"].T)

    wcls_pad = jnp.zeros((H, cpad), jnp.float32).at[:, :num_classes].set(raw["wcls"].T)
    bcls_pad = jnp.zeros((1, cpad), jnp.float32).at[:, :num_classes].set(raw["bcls"])

    return {
        "wih0_t": raw["wih0"].T,                                  # (D, 4H)
        "b0": (raw["bih0"] + raw["bhh0"]).reshape(1, 4 * H),
        "whh_bd": whh_bd,                                         # (2H, 8H)
        "wih1_t": raw["wih1"].T,                                  # (H, 4H)
        "b1": (raw["bih1"] + raw["bhh1"]).reshape(1, 4 * H),
        "wcls_pad": wcls_pad,                                     # (H, CPAD)
        "bcls_pad": bcls_pad,                                     # (1, CPAD)
    }


def recurrent_net_forward(x, kparams, num_classes):
    """x: (B, T, input_dim) float32 -> (B, num_classes) float32."""
    B, T, D = x.shape
    cpad = kparams["wcls_pad"].shape[1]
    # Time-major + flattened so the kernel's per-step read is a leading-axis tile.
    x_tb = jnp.transpose(x, (1, 0, 2)).reshape(T * B, D)

    vmem = pl.BlockSpec(memory_space=pltpu.MemorySpace.VMEM)
    kernel = functools.partial(recurrent_net_kernel, seq_len=T)
    out_pad = pl.pallas_call(
        kernel,
        out_shape=jax.ShapeDtypeStruct((B, cpad), jnp.float32),
        in_specs=[vmem] * 8,
        out_specs=vmem,
    )(x_tb, kparams["wih0_t"], kparams["b0"], kparams["whh_bd"],
      kparams["wih1_t"], kparams["b1"], kparams["wcls_pad"], kparams["bcls_pad"])
    return out_pad[:, :num_classes]


def init_params(key, input_dim, hidden_dim, num_classes):
    """PyTorch-shaped params mirroring nn.LSTM(n_layer=2) + nn.Linear."""
    H = hidden_dim
    bound = 1.0 / np.sqrt(H)
    keys = jax.random.split(key, 10)

    def u(k, shape):
        return jax.random.uniform(k, shape, jnp.float32, -bound, bound)

    return {
        "wih0": u(keys[0], (4 * H, input_dim)),
        "whh0": u(keys[1], (4 * H, H)),
        "bih0": u(keys[2], (4 * H,)),
        "bhh0": u(keys[3], (4 * H,)),
        "wih1": u(keys[4], (4 * H, H)),
        "whh1": u(keys[5], (4 * H, H)),
        "bih1": u(keys[6], (4 * H,)),
        "bhh1": u(keys[7], (4 * H,)),
        "wcls": u(keys[8], (num_classes, H)),
        "bcls": u(keys[9], (num_classes,)),
    }


def reference_forward(x, raw):
    """Pure-JAX reference matching nn.LSTM(batch_first=True, n_layer=2) + Linear."""
    B, T, _ = x.shape
    H = raw["whh0"].shape[1]

    def cell(xt, h, c, wih, whh, bih, bhh):
        g = xt @ wih.T + h @ whh.T + bih + bhh
        i = jax.nn.sigmoid(g[:, :H])
        f = jax.nn.sigmoid(g[:, H:2 * H])
        gg = jnp.tanh(g[:, 2 * H:3 * H])
        o = jax.nn.sigmoid(g[:, 3 * H:])
        c = f * c + i * gg
        return o * jnp.tanh(c), c

    h0 = c0 = h1 = c1 = jnp.zeros((B, H), jnp.float32)
    for t in range(T):
        h0, c0 = cell(x[:, t, :], h0, c0,
                      raw["wih0"], raw["whh0"], raw["bih0"], raw["bhh0"])
        h1, c1 = cell(h0, h1, c1,
                      raw["wih1"], raw["whh1"], raw["bih1"], raw["bhh1"])
    return h1 @ raw["wcls"].T + raw["bcls"]


if __name__ == "__main__":
    # Shapes implied by the module: x is (batch, seq, input_dim); n_layer = 2.
    B, T, INPUT_DIM, HIDDEN_DIM, N_LAYER, NUM_CLASSES = 8, 8, 16, 32, 2, 10

    key = jax.random.PRNGKey(0)
    kx, kp = jax.random.split(key)
    x = jax.random.normal(kx, (B, T, INPUT_DIM), jnp.float32)

    raw = init_params(kp, INPUT_DIM, HIDDEN_DIM, NUM_CLASSES)
    kparams = prepare_kernel_params(raw, NUM_CLASSES)

    out = recurrent_net_forward(x, kparams, NUM_CLASSES)
    out = jax.block_until_ready(out)

    ref = reference_forward(x, raw)
    np.testing.assert_allclose(np.asarray(out), np.asarray(ref),
                               rtol=1e-5, atol=1e-5)
    assert out.shape == (B, NUM_CLASSES)
    print("KERNEL_OK")
</pallas_src>

<mosaic_0001>
module attributes {stable_mosaic.version = 11 : i64} {
  func.func @recurrent_net_kernel(%arg0: memref<64x16xf32, #tpu.memory_space<vmem>>, %arg1: memref<16x128xf32, #tpu.memory_space<vmem>>, %arg2: memref<1x128xf32, #tpu.memory_space<vmem>>, %arg3: memref<64x256xf32, #tpu.memory_space<vmem>>, %arg4: memref<32x128xf32, #tpu.memory_space<vmem>>, %arg5: memref<1x128xf32, #tpu.memory_space<vmem>>, %arg6: memref<32x128xf32, #tpu.memory_space<vmem>>, %arg7: memref<1x128xf32, #tpu.memory_space<vmem>>, %arg8: memref<8x128xf32, #tpu.memory_space<vmem>>) attributes {dimension_semantics = [], scalar_prefetch = 0 : i64, scratch_operands = 0 : i64, tpu.core_type = #tpu.core_type<tc>} {
    %c0 = arith.constant 0 : index
    %c0_0 = arith.constant 0 : index
    %0 = vector.load %arg0[%c0, %c0_0] : memref<64x16xf32, #tpu.memory_space<vmem>>, vector<64x16xf32>
    %c0_1 = arith.constant 0 : index
    %c0_2 = arith.constant 0 : index
    %1 = vector.load %arg1[%c0_1, %c0_2] : memref<16x128xf32, #tpu.memory_space<vmem>>, vector<16x128xf32>
    %cst = arith.constant dense<0.000000e+00> : vector<64x128xf32>
    %2 = tpu.matmul %0, %1, %cst {dimension_numbers = #tpu.dot_dimension_numbers<[1], [0], [0], [1], [0, 0, 1, 1], [], []>} : vector<64x16xf32>, vector<16x128xf32>, vector<64x128xf32> -> vector<64x128xf32>
    %c0_3 = arith.constant 0 : index
    %c0_4 = arith.constant 0 : index
    %3 = vector.load %arg2[%c0_3, %c0_4] : memref<1x128xf32, #tpu.memory_space<vmem>>, vector<1x128xf32>
    %4 = vector.broadcast %3 : vector<1x128xf32> to vector<64x128xf32>
    %5 = arith.addf %2, %4 : vector<64x128xf32>
    %6 = vector.shape_cast %5 : vector<64x128xf32> to vector<8x8x128xf32>
    %c0_5 = arith.constant 0 : index
    %c0_6 = arith.constant 0 : index
    %7 = vector.load %arg3[%c0_5, %c0_6] : memref<64x256xf32, #tpu.memory_space<vmem>>, vector<64x256xf32>
    %c0_7 = arith.constant 0 : index
    %c0_8 = arith.constant 0 : index
    %8 = vector.load %arg4[%c0_7, %c0_8] : memref<32x128xf32, #tpu.memory_space<vmem>>, vector<32x128xf32>
    %c0_9 = arith.constant 0 : index
    %c0_10 = arith.constant 0 : index
    %9 = vector.load %arg5[%c0_9, %c0_10] : memref<1x128xf32, #tpu.memory_space<vmem>>, vector<1x128xf32>
    %10 = vector.shape_cast %9 : vector<1x128xf32> to vector<1x128xf32>
    %11 = vector.broadcast %10 : vector<1x128xf32> to vector<8x128xf32>
    %cst_11 = arith.constant 0.000000e+00 : f32
    %12 = vector.broadcast %cst_11 : f32 to vector<8x32xf32>
    %13 = vector.extract_strided_slice %6 {offsets = [0, 0, 0], sizes = [1, 8, 128], strides = [1, 1, 1]} : vector<8x8x128xf32> to vector<1x8x128xf32>
    %14 = vector.shape_cast %13 : vector<1x8x128xf32> to vector<8x128xf32>
    %15 = arith.negf %14 : vector<8x128xf32>
    %16 = math.exp %15 : vector<8x128xf32>
    %cst_12 = arith.constant 1.000000e+00 : f32
    %17 = vector.broadcast %cst_12 : f32 to vector<8x128xf32>
    %18 = arith.addf %17, %16 : vector<8x128xf32>
    %19 = arith.divf %17, %18 : vector<8x128xf32>
    %20 = math.tanh %14 : vector<8x128xf32>
    %21 = vector.extract_strided_slice %19 {offsets = [0, 0], sizes = [8, 32], strides = [1, 1]} : vector<8x128xf32> to vector<8x32xf32>
    %22 = vector.extract_strided_slice %19 {offsets = [0, 32], sizes = [8, 32], strides = [1, 1]} : vector<8x128xf32> to vector<8x32xf32>
    %23 = vector.extract_strided_slice %20 {offsets = [0, 64], sizes = [8, 32], strides = [1, 1]} : vector<8x128xf32> to vector<8x32xf32>
    %24 = vector.extract_strided_slice %19 {offsets = [0, 96], sizes = [8, 32], strides = [1, 1]} : vector<8x128xf32> to vector<8x32xf32>
    %25 = arith.mulf %22, %12 : vector<8x32xf32>
    %26 = arith.mulf %21, %23 : vector<8x32xf32>
    %27 = arith.addf %25, %26 : vector<8x32xf32>
    %28 = math.tanh %27 : vector<8x32xf32>
    %29 = arith.mulf %24, %28 : vector<8x32xf32>
    %cst_13 = arith.constant dense<0.000000e+00> : vector<8x128xf32>
    %30 = tpu.matmul %29, %8, %cst_13 {dimension_numbers = #tpu.dot_dimension_numbers<[1], [0], [0], [1], [0, 0, 1, 1], [], []>} : vector<8x32xf32>, vector<32x128xf32>, vector<8x128xf32> -> vector<8x128xf32>
    %31 = arith.addf %30, %11 : vector<8x128xf32>
    %32 = arith.negf %31 : vector<8x128xf32>
    %33 = math.exp %32 : vector<8x128xf32>
    %cst_14 = arith.constant 1.000000e+00 : f32
    %34 = vector.broadcast %cst_14 : f32 to vector<8x128xf32>
    %35 = arith.addf %34, %33 : vector<8x128xf32>
    %36 = arith.divf %34, %35 : vector<8x128xf32>
    %37 = math.tanh %31 : vector<8x128xf32>
    %38 = vector.extract_strided_slice %36 {offsets = [0, 0], sizes = [8, 32], strides = [1, 1]} : vector<8x128xf32> to vector<8x32xf32>
    %39 = vector.extract_strided_slice %36 {offsets = [0, 32], sizes = [8, 32], strides = [1, 1]} : vector<8x128xf32> to vector<8x32xf32>
    %40 = vector.extract_strided_slice %37 {offsets = [0, 64], sizes = [8, 32], strides = [1, 1]} : vector<8x128xf32> to vector<8x32xf32>
    %41 = vector.extract_strided_slice %36 {offsets = [0, 96], sizes = [8, 32], strides = [1, 1]} : vector<8x128xf32> to vector<8x32xf32>
    %42 = arith.mulf %39, %12 : vector<8x32xf32>
    %43 = arith.mulf %38, %40 : vector<8x32xf32>
    %44 = arith.addf %42, %43 : vector<8x32xf32>
    %45 = math.tanh %44 : vector<8x32xf32>
    %46 = arith.mulf %41, %45 : vector<8x32xf32>
    %47 = tpu.concatenate %29, %46 in 1 : vector<8x32xf32>, vector<8x32xf32> -> vector<8x64xf32>
    %cst_15 = arith.constant dense<0.000000e+00> : vector<8x256xf32>
    %48 = tpu.matmul %47, %7, %cst_15 {dimension_numbers = #tpu.dot_dimension_numbers<[1], [0], [0], [1], [0, 0, 1, 1], [], []>} : vector<8x64xf32>, vector<64x256xf32>, vector<8x256xf32> -> vector<8x256xf32>
    %49 = vector.extract_strided_slice %6 {offsets = [1, 0, 0], sizes = [1, 8, 128], strides = [1, 1, 1]} : vector<8x8x128xf32> to vector<1x8x128xf32>
    %50 = vector.shape_cast %49 : vector<1x8x128xf32> to vector<8x128xf32>
    %51 = vector.extract_strided_slice %48 {offsets = [0, 0], sizes = [8, 128], strides = [1, 1]} : vector<8x256xf32> to vector<8x128xf32>
    %52 = arith.addf %50, %51 : vector<8x128xf32>
    %53 = arith.negf %52 : vector<8x128xf32>
    %54 = math.exp %53 : vector<8x128xf32>
    %cst_16 = arith.constant 1.000000e+00 : f32
    %55 = vector.broadcast %cst_16 : f32 to vector<8x128xf32>
    %56 = arith.addf %55, %54 : vector<8x128xf32>
    %57 = arith.divf %55, %56 : vector<8x128xf32>
    %58 = math.tanh %52 : vector<8x128xf32>
    %59 = vector.extract_strided_slice %57 {offsets = [0, 0], sizes = [8, 32], strides = [1, 1]} : vector<8x128xf32> to vector<8x32xf32>
    %60 = vector.extract_strided_slice %57 {offsets = [0, 32], sizes = [8, 32], strides = [1, 1]} : vector<8x128xf32> to vector<8x32xf32>
    %61 = vector.extract_strided_slice %58 {offsets = [0, 64], sizes = [8, 32], strides = [1, 1]} : vector<8x128xf32> to vector<8x32xf32>
    %62 = vector.extract_strided_slice %57 {offsets = [0, 96], sizes = [8, 32], strides = [1, 1]} : vector<8x128xf32> to vector<8x32xf32>
    %63 = arith.mulf %60, %27 : vector<8x32xf32>
    %64 = arith.mulf %59, %61 : vector<8x32xf32>
    %65 = arith.addf %63, %64 : vector<8x32xf32>
    %66 = math.tanh %65 : vector<8x32xf32>
    %67 = arith.mulf %62, %66 : vector<8x32xf32>
    %cst_17 = arith.constant dense<0.000000e+00> : vector<8x128xf32>
    %68 = tpu.matmul %67, %8, %cst_17 {dimension_numbers = #tpu.dot_dimension_numbers<[1], [0], [0], [1], [0, 0, 1, 1], [], []>} : vector<8x32xf32>, vector<32x128xf32>, vector<8x128xf32> -> vector<8x128xf32>
    %69 = vector.extract_strided_slice %48 {offsets = [0, 128], sizes = [8, 128], strides = [1, 1]} : vector<8x256xf32> to vector<8x128xf32>
    %70 = arith.addf %68, %69 : vector<8x128xf32>
    %71 = arith.addf %70, %11 : vector<8x128xf32>
    %72 = arith.negf %71 : vector<8x128xf32>
    %73 = math.exp %72 : vector<8x128xf32>
    %cst_18 = arith.constant 1.000000e+00 : f32
    %74 = vector.broadcast %cst_18 : f32 to vector<8x128xf32>
    %75 = arith.addf %74, %73 : vector<8x128xf32>
    %76 = arith.divf %74, %75 : vector<8x128xf32>
    %77 = math.tanh %71 : vector<8x128xf32>
    %78 = vector.extract_strided_slice %76 {offsets = [0, 0], sizes = [8, 32], strides = [1, 1]} : vector<8x128xf32> to vector<8x32xf32>
    %79 = vector.extract_strided_slice %76 {offsets = [0, 32], sizes = [8, 32], strides = [1, 1]} : vector<8x128xf32> to vector<8x32xf32>
    %80 = vector.extract_strided_slice %77 {offsets = [0, 64], sizes = [8, 32], strides = [1, 1]} : vector<8x128xf32> to vector<8x32xf32>
    %81 = vector.extract_strided_slice %76 {offsets = [0, 96], sizes = [8, 32], strides = [1, 1]} : vector<8x128xf32> to vector<8x32xf32>
    %82 = arith.mulf %79, %44 : vector<8x32xf32>
    %83 = arith.mulf %78, %80 : vector<8x32xf32>
    %84 = arith.addf %82, %83 : vector<8x32xf32>
    %85 = math.tanh %84 : vector<8x32xf32>
    %86 = arith.mulf %81, %85 : vector<8x32xf32>
    %87 = tpu.concatenate %67, %86 in 1 : vector<8x32xf32>, vector<8x32xf32> -> vector<8x64xf32>
    %cst_19 = arith.constant dense<0.000000e+00> : vector<8x256xf32>
    %88 = tpu.matmul %87, %7, %cst_19 {dimension_numbers = #tpu.dot_dimension_numbers<[1], [0], [0], [1], [0, 0, 1, 1], [], []>} : vector<8x64xf32>, vector<64x256xf32>, vector<8x256xf32> -> vector<8x256xf32>
    %89 = vector.extract_strided_slice %6 {offsets = [2, 0, 0], sizes = [1, 8, 128], strides = [1, 1, 1]} : vector<8x8x128xf32> to vector<1x8x128xf32>
    %90 = vector.shape_cast %89 : vector<1x8x128xf32> to vector<8x128xf32>
    %91 = vector.extract_strided_slice %88 {offsets = [0, 0], sizes = [8, 128], strides = [1, 1]} : vector<8x256xf32> to vector<8x128xf32>
    %92 = arith.addf %90, %91 : vector<8x128xf32>
    %93 = arith.negf %92 : vector<8x128xf32>
    %94 = math.exp %93 : vector<8x128xf32>
    %cst_20 = arith.constant 1.000000e+00 : f32
    %95 = vector.broadcast %cst_20 : f32 to vector<8x128xf32>
    %96 = arith.addf %95, %94 : vector<8x128xf32>
    %97 = arith.divf %95, %96 : vector<8x128xf32>
    %98 = math.tanh %92 : vector<8x128xf32>
    %99 = vector.extract_strided_slice %97 {offsets = [0, 0], sizes = [8, 32], strides = [1, 1]} : vector<8x128xf32> to vector<8x32xf32>
    %100 = vector.extract_strided_slice %97 {offsets = [0, 32], sizes = [8, 32], strides = [1, 1]} : vector<8x128xf32> to vector<8x32xf32>
    %101 = vector.extract_strided_slice %98 {offsets = [0, 64], sizes = [8, 32], strides = [1, 1]} : vector<8x128xf32> to vector<8x32xf32>
    %102 = vector.extract_strided_slice %97 {offsets = [0, 96], sizes = [8, 32], strides = [1, 1]} : vector<8x128xf32> to vector<8x32xf32>
    %103 = arith.mulf %100, %65 : vector<8x32xf32>
    %104 = arith.mulf %99, %101 : vector<8x32xf32>
    %105 = arith.addf %103, %104 : vector<8x32xf32>
    %106 = math.tanh %105 : vector<8x32xf32>
    %107 = arith.mulf %102, %106 : vector<8x32xf32>
    %cst_21 = arith.constant dense<0.000000e+00> : vector<8x128xf32>
    %108 = tpu.matmul %107, %8, %cst_21 {dimension_numbers = #tpu.dot_dimension_numbers<[1], [0], [0], [1], [0, 0, 1, 1], [], []>} : vector<8x32xf32>, vector<32x128xf32>, vector<8x128xf32> -> vector<8x128xf32>
    %109 = vector.extract_strided_slice %88 {offsets = [0, 128], sizes = [8, 128], strides = [1, 1]} : vector<8x256xf32> to vector<8x128xf32>
    %110 = arith.addf %108, %109 : vector<8x128xf32>
    %111 = arith.addf %110, %11 : vector<8x128xf32>
    %112 = arith.negf %111 : vector<8x128xf32>
    %113 = math.exp %112 : vector<8x128xf32>
    %cst_22 = arith.constant 1.000000e+00 : f32
    %114 = vector.broadcast %cst_22 : f32 to vector<8x128xf32>
    %115 = arith.addf %114, %113 : vector<8x128xf32>
    %116 = arith.divf %114, %115 : vector<8x128xf32>
    %117 = math.tanh %111 : vector<8x128xf32>
    %118 = vector.extract_strided_slice %116 {offsets = [0, 0], sizes = [8, 32], strides = [1, 1]} : vector<8x128xf32> to vector<8x32xf32>
    %119 = vector.extract_strided_slice %116 {offsets = [0, 32], sizes = [8, 32], strides = [1, 1]} : vector<8x128xf32> to vector<8x32xf32>
    %120 = vector.extract_strided_slice %117 {offsets = [0, 64], sizes = [8, 32], strides = [1, 1]} : vector<8x128xf32> to vector<8x32xf32>
    %121 = vector.extract_strided_slice %116 {offsets = [0, 96], sizes = [8, 32], strides = [1, 1]} : vector<8x128xf32> to vector<8x32xf32>
    %122 = arith.mulf %119, %84 : vector<8x32xf32>
    %123 = arith.mulf %118, %120 : vector<8x32xf32>
    %124 = arith.addf %122, %123 : vector<8x32xf32>
    %125 = math.tanh %124 : vector<8x32xf32>
    %126 = arith.mulf %121, %125 : vector<8x32xf32>
    %127 = tpu.concatenate %107, %126 in 1 : vector<8x32xf32>, vector<8x32xf32> -> vector<8x64xf32>
    %cst_23 = arith.constant dense<0.000000e+00> : vector<8x256xf32>
    %128 = tpu.matmul %127, %7, %cst_23 {dimension_numbers = #tpu.dot_dimension_numbers<[1], [0], [0], [1], [0, 0, 1, 1], [], []>} : vector<8x64xf32>, vector<64x256xf32>, vector<8x256xf32> -> vector<8x256xf32>
    %129 = vector.extract_strided_slice %6 {offsets = [3, 0, 0], sizes = [1, 8, 128], strides = [1, 1, 1]} : vector<8x8x128xf32> to vector<1x8x128xf32>
    %130 = vector.shape_cast %129 : vector<1x8x128xf32> to vector<8x128xf32>
    %131 = vector.extract_strided_slice %128 {offsets = [0, 0], sizes = [8, 128], strides = [1, 1]} : vector<8x256xf32> to vector<8x128xf32>
    %132 = arith.addf %130, %131 : vector<8x128xf32>
    %133 = arith.negf %132 : vector<8x128xf32>
    %134 = math.exp %133 : vector<8x128xf32>
    %cst_24 = arith.constant 1.000000e+00 : f32
    %135 = vector.broadcast %cst_24 : f32 to vector<8x128xf32>
    %136 = arith.addf %135, %134 : vector<8x128xf32>
    %137 = arith.divf %135, %136 : vector<8x128xf32>
    %138 = math.tanh %132 : vector<8x128xf32>
    %139 = vector.extract_strided_slice %137 {offsets = [0, 0], sizes = [8, 32], strides = [1, 1]} : vector<8x128xf32> to vector<8x32xf32>
    %140 = vector.extract_strided_slice %137 {offsets = [0, 32], sizes = [8, 32], strides = [1, 1]} : vector<8x128xf32> to vector<8x32xf32>
    %141 = vector.extract_strided_slice %138 {offsets = [0, 64], sizes = [8, 32], strides = [1, 1]} : vector<8x128xf32> to vector<8x32xf32>
    %142 = vector.extract_strided_slice %137 {offsets = [0, 96], sizes = [8, 32], strides = [1, 1]} : vector<8x128xf32> to vector<8x32xf32>
    %143 = arith.mulf %140, %105 : vector<8x32xf32>
    %144 = arith.mulf %139, %141 : vector<8x32xf32>
    %145 = arith.addf %143, %144 : vector<8x32xf32>
    %146 = math.tanh %145 : vector<8x32xf32>
    %147 = arith.mulf %142, %146 : vector<8x32xf32>
    %cst_25 = arith.constant dense<0.000000e+00> : vector<8x128xf32>
    %148 = tpu.matmul %147, %8, %cst_25 {dimension_numbers = #tpu.dot_dimension_numbers<[1], [0], [0], [1], [0, 0, 1, 1], [], []>} : vector<8x32xf32>, vector<32x128xf32>, vector<8x128xf32> -> vector<8x128xf32>
    %149 = vector.extract_strided_slice %128 {offsets = [0, 128], sizes = [8, 128], strides = [1, 1]} : vector<8x256xf32> to vector<8x128xf32>
    %150 = arith.addf %148, %149 : vector<8x128xf32>
    %151 = arith.addf %150, %11 : vector<8x128xf32>
    %152 = arith.negf %151 : vector<8x128xf32>
    %153 = math.exp %152 : vector<8x128xf32>
    %cst_26 = arith.constant 1.000000e+00 : f32
    %154 = vector.broadcast %cst_26 : f32 to vector<8x128xf32>
    %155 = arith.addf %154, %153 : vector<8x128xf32>
    %156 = arith.divf %154, %155 : vector<8x128xf32>
    %157 = math.tanh %151 : vector<8x128xf32>
    %158 = vector.extract_strided_slice %156 {offsets = [0, 0], sizes = [8, 32], strides = [1, 1]} : vector<8x128xf32> to vector<8x32xf32>
    %159 = vector.extract_strided_slice %156 {offsets = [0, 32], sizes = [8, 32], strides = [1, 1]} : vector<8x128xf32> to vector<8x32xf32>
    %160 = vector.extract_strided_slice %157 {offsets = [0, 64], sizes = [8, 32], strides = [1, 1]} : vector<8x128xf32> to vector<8x32xf32>
    %161 = vector.extract_strided_slice %156 {offsets = [0, 96], sizes = [8, 32], strides = [1, 1]} : vector<8x128xf32> to vector<8x32xf32>
    %162 = arith.mulf %159, %124 : vector<8x32xf32>
    %163 = arith.mulf %158, %160 : vector<8x32xf32>
    %164 = arith.addf %162, %163 : vector<8x32xf32>
    %165 = math.tanh %164 : vector<8x32xf32>
    %166 = arith.mulf %161, %165 : vector<8x32xf32>
    %167 = tpu.concatenate %147, %166 in 1 : vector<8x32xf32>, vector<8x32xf32> -> vector<8x64xf32>
    %cst_27 = arith.constant dense<0.000000e+00> : vector<8x256xf32>
    %168 = tpu.matmul %167, %7, %cst_27 {dimension_numbers = #tpu.dot_dimension_numbers<[1], [0], [0], [1], [0, 0, 1, 1], [], []>} : vector<8x64xf32>, vector<64x256xf32>, vector<8x256xf32> -> vector<8x256xf32>
    %169 = vector.extract_strided_slice %6 {offsets = [4, 0, 0], sizes = [1, 8, 128], strides = [1, 1, 1]} : vector<8x8x128xf32> to vector<1x8x128xf32>
    %170 = vector.shape_cast %169 : vector<1x8x128xf32> to vector<8x128xf32>
    %171 = vector.extract_strided_slice %168 {offsets = [0, 0], sizes = [8, 128], strides = [1, 1]} : vector<8x256xf32> to vector<8x128xf32>
    %172 = arith.addf %170, %171 : vector<8x128xf32>
    %173 = arith.negf %172 : vector<8x128xf32>
    %174 = math.exp %173 : vector<8x128xf32>
    %cst_28 = arith.constant 1.000000e+00 : f32
    %175 = vector.broadcast %cst_28 : f32 to vector<8x128xf32>
    %176 = arith.addf %175, %174 : vector<8x128xf32>
    %177 = arith.divf %175, %176 : vector<8x128xf32>
    %178 = math.tanh %172 : vector<8x128xf32>
    %179 = vector.extract_strided_slice %177 {offsets = [0, 0], sizes = [8, 32], strides = [1, 1]} : vector<8x128xf32> to vector<8x32xf32>
    %180 = vector.extract_strided_slice %177 {offsets = [0, 32], sizes = [8, 32], strides = [1, 1]} : vector<8x128xf32> to vector<8x32xf32>
    %181 = vector.extract_strided_slice %178 {offsets = [0, 64], sizes = [8, 32], strides = [1, 1]} : vector<8x128xf32> to vector<8x32xf32>
    %182 = vector.extract_strided_slice %177 {offsets = [0, 96], sizes = [8, 32], strides = [1, 1]} : vector<8x128xf32> to vector<8x32xf32>
    %183 = arith.mulf %180, %145 : vector<8x32xf32>
    %184 = arith.mulf %179, %181 : vector<8x32xf32>
    %185 = arith.addf %183, %184 : vector<8x32xf32>
    %186 = math.tanh %185 : vector<8x32xf32>
    %187 = arith.mulf %182, %186 : vector<8x32xf32>
    %cst_29 = arith.constant dense<0.000000e+00> : vector<8x128xf32>
    %188 = tpu.matmul %187, %8, %cst_29 {dimension_numbers = #tpu.dot_dimension_numbers<[1], [0], [0], [1], [0, 0, 1, 1], [], []>} : vector<8x32xf32>, vector<32x128xf32>, vector<8x128xf32> -> vector<8x128xf32>
    %189 = vector.extract_strided_slice %168 {offsets = [0, 128], sizes = [8, 128], strides = [1, 1]} : vector<8x256xf32> to vector<8x128xf32>
    %190 = arith.addf %188, %189 : vector<8x128xf32>
    %191 = arith.addf %190, %11 : vector<8x128xf32>
    %192 = arith.negf %191 : vector<8x128xf32>
    %193 = math.exp %192 : vector<8x128xf32>
    %cst_30 = arith.constant 1.000000e+00 : f32
    %194 = vector.broadcast %cst_30 : f32 to vector<8x128xf32>
    %195 = arith.addf %194, %193 : vector<8x128xf32>
    %196 = arith.divf %194, %195 : vector<8x128xf32>
    %197 = math.tanh %191 : vector<8x128xf32>
    %198 = vector.extract_strided_slice %196 {offsets = [0, 0], sizes = [8, 32], strides = [1, 1]} : vector<8x128xf32> to vector<8x32xf32>
    %199 = vector.extract_strided_slice %196 {offsets = [0, 32], sizes = [8, 32], strides = [1, 1]} : vector<8x128xf32> to vector<8x32xf32>
    %200 = vector.extract_strided_slice %197 {offsets = [0, 64], sizes = [8, 32], strides = [1, 1]} : vector<8x128xf32> to vector<8x32xf32>
    %201 = vector.extract_strided_slice %196 {offsets = [0, 96], sizes = [8, 32], strides = [1, 1]} : vector<8x128xf32> to vector<8x32xf32>
    %202 = arith.mulf %199, %164 : vector<8x32xf32>
    %203 = arith.mulf %198, %200 : vector<8x32xf32>
    %204 = arith.addf %202, %203 : vector<8x32xf32>
    %205 = math.tanh %204 : vector<8x32xf32>
    %206 = arith.mulf %201, %205 : vector<8x32xf32>
    %207 = tpu.concatenate %187, %206 in 1 : vector<8x32xf32>, vector<8x32xf32> -> vector<8x64xf32>
    %cst_31 = arith.constant dense<0.000000e+00> : vector<8x256xf32>
    %208 = tpu.matmul %207, %7, %cst_31 {dimension_numbers = #tpu.dot_dimension_numbers<[1], [0], [0], [1], [0, 0, 1, 1], [], []>} : vector<8x64xf32>, vector<64x256xf32>, vector<8x256xf32> -> vector<8x256xf32>
    %209 = vector.extract_strided_slice %6 {offsets = [5, 0, 0], sizes = [1, 8, 128], strides = [1, 1, 1]} : vector<8x8x128xf32> to vector<1x8x128xf32>
    %210 = vector.shape_cast %209 : vector<1x8x128xf32> to vector<8x128xf32>
    %211 = vector.extract_strided_slice %208 {offsets = [0, 0], sizes = [8, 128], strides = [1, 1]} : vector<8x256xf32> to vector<8x128xf32>
    %212 = arith.addf %210, %211 : vector<8x128xf32>
    %213 = arith.negf %212 : vector<8x128xf32>
    %214 = math.exp %213 : vector<8x128xf32>
    %cst_32 = arith.constant 1.000000e+00 : f32
    %215 = vector.broadcast %cst_32 : f32 to vector<8x128xf32>
    %216 = arith.addf %215, %214 : vector<8x128xf32>
    %217 = arith.divf %215, %216 : vector<8x128xf32>
    %218 = math.tanh %212 : vector<8x128xf32>
    %219 = vector.extract_strided_slice %217 {offsets = [0, 0], sizes = [8, 32], strides = [1, 1]} : vector<8x128xf32> to vector<8x32xf32>
    %220 = vector.extract_strided_slice %217 {offsets = [0, 32], sizes = [8, 32], strides = [1, 1]} : vector<8x128xf32> to vector<8x32xf32>
    %221 = vector.extract_strided_slice %218 {offsets = [0, 64], sizes = [8, 32], strides = [1, 1]} : vector<8x128xf32> to vector<8x32xf32>
    %222 = vector.extract_strided_slice %217 {offsets = [0, 96], sizes = [8, 32], strides = [1, 1]} : vector<8x128xf32> to vector<8x32xf32>
    %223 = arith.mulf %220, %185 : vector<8x32xf32>
    %224 = arith.mulf %219, %221 : vector<8x32xf32>
    %225 = arith.addf %223, %224 : vector<8x32xf32>
    %226 = math.tanh %225 : vector<8x32xf32>
    %227 = arith.mulf %222, %226 : vector<8x32xf32>
    %cst_33 = arith.constant dense<0.000000e+00> : vector<8x128xf32>
    %228 = tpu.matmul %227, %8, %cst_33 {dimension_numbers = #tpu.dot_dimension_numbers<[1], [0], [0], [1], [0, 0, 1, 1], [], []>} : vector<8x32xf32>, vector<32x128xf32>, vector<8x128xf32> -> vector<8x128xf32>
    %229 = vector.extract_strided_slice %208 {offsets = [0, 128], sizes = [8, 128], strides = [1, 1]} : vector<8x256xf32> to vector<8x128xf32>
    %230 = arith.addf %228, %229 : vector<8x128xf32>
    %231 = arith.addf %230, %11 : vector<8x128xf32>
    %232 = arith.negf %231 : vector<8x128xf32>
    %233 = math.exp %232 : vector<8x128xf32>
    %cst_34 = arith.constant 1.000000e+00 : f32
    %234 = vector.broadcast %cst_34 : f32 to vector<8x128xf32>
    %235 = arith.addf %234, %233 : vector<8x128xf32>
    %236 = arith.divf %234, %235 : vector<8x128xf32>
    %237 = math.tanh %231 : vector<8x128xf32>
    %238 = vector.extract_strided_slice %236 {offsets = [0, 0], sizes = [8, 32], strides = [1, 1]} : vector<8x128xf32> to vector<8x32xf32>
    %239 = vector.extract_strided_slice %236 {offsets = [0, 32], sizes = [8, 32], strides = [1, 1]} : vector<8x128xf32> to vector<8x32xf32>
    %240 = vector.extract_strided_slice %237 {offsets = [0, 64], sizes = [8, 32], strides = [1, 1]} : vector<8x128xf32> to vector<8x32xf32>
    %241 = vector.extract_strided_slice %236 {offsets = [0, 96], sizes = [8, 32], strides = [1, 1]} : vector<8x128xf32> to vector<8x32xf32>
    %242 = arith.mulf %239, %204 : vector<8x32xf32>
    %243 = arith.mulf %238, %240 : vector<8x32xf32>
    %244 = arith.addf %242, %243 : vector<8x32xf32>
    %245 = math.tanh %244 : vector<8x32xf32>
    %246 = arith.mulf %241, %245 : vector<8x32xf32>
    %247 = tpu.concatenate %227, %246 in 1 : vector<8x32xf32>, vector<8x32xf32> -> vector<8x64xf32>
    %cst_35 = arith.constant dense<0.000000e+00> : vector<8x256xf32>
    %248 = tpu.matmul %247, %7, %cst_35 {dimension_numbers = #tpu.dot_dimension_numbers<[1], [0], [0], [1], [0, 0, 1, 1], [], []>} : vector<8x64xf32>, vector<64x256xf32>, vector<8x256xf32> -> vector<8x256xf32>
    %249 = vector.extract_strided_slice %6 {offsets = [6, 0, 0], sizes = [1, 8, 128], strides = [1, 1, 1]} : vector<8x8x128xf32> to vector<1x8x128xf32>
    %250 = vector.shape_cast %249 : vector<1x8x128xf32> to vector<8x128xf32>
    %251 = vector.extract_strided_slice %248 {offsets = [0, 0], sizes = [8, 128], strides = [1, 1]} : vector<8x256xf32> to vector<8x128xf32>
    %252 = arith.addf %250, %251 : vector<8x128xf32>
    %253 = arith.negf %252 : vector<8x128xf32>
    %254 = math.exp %253 : vector<8x128xf32>
    %cst_36 = arith.constant 1.000000e+00 : f32
    %255 = vector.broadcast %cst_36 : f32 to vector<8x128xf32>
    %256 = arith.addf %255, %254 : vector<8x128xf32>
    %257 = arith.divf %255, %256 : vector<8x128xf32>
    %258 = math.tanh %252 : vector<8x128xf32>
    %259 = vector.extract_strided_slice %257 {offsets = [0, 0], sizes = [8, 32], strides = [1, 1]} : vector<8x128xf32> to vector<8x32xf32>
    %260 = vector.extract_strided_slice %257 {offsets = [0, 32], sizes = [8, 32], strides = [1, 1]} : vector<8x128xf32> to vector<8x32xf32>
    %261 = vector.extract_strided_slice %258 {offsets = [0, 64], sizes = [8, 32], strides = [1, 1]} : vector<8x128xf32> to vector<8x32xf32>
    %262 = vector.extract_strided_slice %257 {offsets = [0, 96], sizes = [8, 32], strides = [1, 1]} : vector<8x128xf32> to vector<8x32xf32>
    %263 = arith.mulf %260, %225 : vector<8x32xf32>
    %264 = arith.mulf %259, %261 : vector<8x32xf32>
    %265 = arith.addf %263, %264 : vector<8x32xf32>
    %266 = math.tanh %265 : vector<8x32xf32>
    %267 = arith.mulf %262, %266 : vector<8x32xf32>
    %cst_37 = arith.constant dense<0.000000e+00> : vector<8x128xf32>
    %268 = tpu.matmul %267, %8, %cst_37 {dimension_numbers = #tpu.dot_dimension_numbers<[1], [0], [0], [1], [0, 0, 1, 1], [], []>} : vector<8x32xf32>, vector<32x128xf32>, vector<8x128xf32> -> vector<8x128xf32>
    %269 = vector.extract_strided_slice %248 {offsets = [0, 128], sizes = [8, 128], strides = [1, 1]} : vector<8x256xf32> to vector<8x128xf32>
    %270 = arith.addf %268, %269 : vector<8x128xf32>
    %271 = arith.addf %270, %11 : vector<8x128xf32>
    %272 = arith.negf %271 : vector<8x128xf32>
    %273 = math.exp %272 : vector<8x128xf32>
    %cst_38 = arith.constant 1.000000e+00 : f32
    %274 = vector.broadcast %cst_38 : f32 to vector<8x128xf32>
    %275 = arith.addf %274, %273 : vector<8x128xf32>
    %276 = arith.divf %274, %275 : vector<8x128xf32>
    %277 = math.tanh %271 : vector<8x128xf32>
    %278 = vector.extract_strided_slice %276 {offsets = [0, 0], sizes = [8, 32], strides = [1, 1]} : vector<8x128xf32> to vector<8x32xf32>
    %279 = vector.extract_strided_slice %276 {offsets = [0, 32], sizes = [8, 32], strides = [1, 1]} : vector<8x128xf32> to vector<8x32xf32>
    %280 = vector.extract_strided_slice %277 {offsets = [0, 64], sizes = [8, 32], strides = [1, 1]} : vector<8x128xf32> to vector<8x32xf32>
    %281 = vector.extract_strided_slice %276 {offsets = [0, 96], sizes = [8, 32], strides = [1, 1]} : vector<8x128xf32> to vector<8x32xf32>
    %282 = arith.mulf %279, %244 : vector<8x32xf32>
    %283 = arith.mulf %278, %280 : vector<8x32xf32>
    %284 = arith.addf %282, %283 : vector<8x32xf32>
    %285 = math.tanh %284 : vector<8x32xf32>
    %286 = arith.mulf %281, %285 : vector<8x32xf32>
    %287 = tpu.concatenate %267, %286 in 1 : vector<8x32xf32>, vector<8x32xf32> -> vector<8x64xf32>
    %cst_39 = arith.constant dense<0.000000e+00> : vector<8x256xf32>
    %288 = tpu.matmul %287, %7, %cst_39 {dimension_numbers = #tpu.dot_dimension_numbers<[1], [0], [0], [1], [0, 0, 1, 1], [], []>} : vector<8x64xf32>, vector<64x256xf32>, vector<8x256xf32> -> vector<8x256xf32>
    %289 = vector.extract_strided_slice %6 {offsets = [7, 0, 0], sizes = [1, 8, 128], strides = [1, 1, 1]} : vector<8x8x128xf32> to vector<1x8x128xf32>
    %290 = vector.shape_cast %289 : vector<1x8x128xf32> to vector<8x128xf32>
    %291 = vector.extract_strided_slice %288 {offsets = [0, 0], sizes = [8, 128], strides = [1, 1]} : vector<8x256xf32> to vector<8x128xf32>
    %292 = arith.addf %290, %291 : vector<8x128xf32>
    %293 = arith.negf %292 : vector<8x128xf32>
    %294 = math.exp %293 : vector<8x128xf32>
    %cst_40 = arith.constant 1.000000e+00 : f32
    %295 = vector.broadcast %cst_40 : f32 to vector<8x128xf32>
    %296 = arith.addf %295, %294 : vector<8x128xf32>
    %297 = arith.divf %295, %296 : vector<8x128xf32>
    %298 = math.tanh %292 : vector<8x128xf32>
    %299 = vector.extract_strided_slice %297 {offsets = [0, 0], sizes = [8, 32], strides = [1, 1]} : vector<8x128xf32> to vector<8x32xf32>
    %300 = vector.extract_strided_slice %297 {offsets = [0, 32], sizes = [8, 32], strides = [1, 1]} : vector<8x128xf32> to vector<8x32xf32>
    %301 = vector.extract_strided_slice %298 {offsets = [0, 64], sizes = [8, 32], strides = [1, 1]} : vector<8x128xf32> to vector<8x32xf32>
    %302 = vector.extract_strided_slice %297 {offsets = [0, 96], sizes = [8, 32], strides = [1, 1]} : vector<8x128xf32> to vector<8x32xf32>
    %303 = arith.mulf %300, %265 : vector<8x32xf32>
    %304 = arith.mulf %299, %301 : vector<8x32xf32>
    %305 = arith.addf %303, %304 : vector<8x32xf32>
    %306 = math.tanh %305 : vector<8x32xf32>
    %307 = arith.mulf %302, %306 : vector<8x32xf32>
    %cst_41 = arith.constant dense<0.000000e+00> : vector<8x128xf32>
    %308 = tpu.matmul %307, %8, %cst_41 {dimension_numbers = #tpu.dot_dimension_numbers<[1], [0], [0], [1], [0, 0, 1, 1], [], []>} : vector<8x32xf32>, vector<32x128xf32>, vector<8x128xf32> -> vector<8x128xf32>
    %309 = vector.extract_strided_slice %288 {offsets = [0, 128], sizes = [8, 128], strides = [1, 1]} : vector<8x256xf32> to vector<8x128xf32>
    %310 = arith.addf %308, %309 : vector<8x128xf32>
    %311 = arith.addf %310, %11 : vector<8x128xf32>
    %312 = arith.negf %311 : vector<8x128xf32>
    %313 = math.exp %312 : vector<8x128xf32>
    %cst_42 = arith.constant 1.000000e+00 : f32
    %314 = vector.broadcast %cst_42 : f32 to vector<8x128xf32>
    %315 = arith.addf %314, %313 : vector<8x128xf32>
    %316 = arith.divf %314, %315 : vector<8x128xf32>
    %317 = math.tanh %311 : vector<8x128xf32>
    %318 = vector.extract_strided_slice %316 {offsets = [0, 0], sizes = [8, 32], strides = [1, 1]} : vector<8x128xf32> to vector<8x32xf32>
    %319 = vector.extract_strided_slice %316 {offsets = [0, 32], sizes = [8, 32], strides = [1, 1]} : vector<8x128xf32> to vector<8x32xf32>
    %320 = vector.extract_strided_slice %317 {offsets = [0, 64], sizes = [8, 32], strides = [1, 1]} : vector<8x128xf32> to vector<8x32xf32>
    %321 = vector.extract_strided_slice %316 {offsets = [0, 96], sizes = [8, 32], strides = [1, 1]} : vector<8x128xf32> to vector<8x32xf32>
    %322 = arith.mulf %319, %284 : vector<8x32xf32>
    %323 = arith.mulf %318, %320 : vector<8x32xf32>
    %324 = arith.addf %322, %323 : vector<8x32xf32>
    %325 = math.tanh %324 : vector<8x32xf32>
    %326 = arith.mulf %321, %325 : vector<8x32xf32>
    %c0_43 = arith.constant 0 : index
    %c0_44 = arith.constant 0 : index
    %327 = vector.load %arg6[%c0_43, %c0_44] : memref<32x128xf32, #tpu.memory_space<vmem>>, vector<32x128xf32>
    %cst_45 = arith.constant dense<0.000000e+00> : vector<8x128xf32>
    %328 = tpu.matmul %326, %327, %cst_45 {dimension_numbers = #tpu.dot_dimension_numbers<[1], [0], [0], [1], [0, 0, 1, 1], [], []>} : vector<8x32xf32>, vector<32x128xf32>, vector<8x128xf32> -> vector<8x128xf32>
    %c0_46 = arith.constant 0 : index
    %c0_47 = arith.constant 0 : index
    %329 = vector.load %arg7[%c0_46, %c0_47] : memref<1x128xf32, #tpu.memory_space<vmem>>, vector<1x128xf32>
    %330 = vector.broadcast %329 : vector<1x128xf32> to vector<8x128xf32>
    %331 = arith.addf %328, %330 : vector<8x128xf32>
    %c0_48 = arith.constant 0 : index
    %c0_49 = arith.constant 0 : index
    %332 = vector.load %arg8[%c0_48, %c0_49] : memref<8x128xf32, #tpu.memory_space<vmem>>, vector<8x128xf32>
    tpu.vector_store %arg8[%c0_48, %c0_49], %331 {strides = array<i32>} : memref<8x128xf32, #tpu.memory_space<vmem>>, vector<8x128xf32>,
    return
  }
}

</mosaic_0001>

<llo_original>
// kernel: tpu_custom_call.1
$region0: #{tpu_custom_call.1}
  #allocation0 [shape = 'u32[]', space=smem, size = 0x4, offset = 0x4, fixed_abs, tag = 'smem constant byte address 0x4 - core index']
  #allocation1 [shape = 'u32[144,128]{1,0:T(1,128)}', space=vmem, size = 0x12000, scoped, tag = 'internal scratch']
  %s0 = inlined_call_operand.vmem [shape: f32[64,16], index: 0, kind: input, shape index: {}]
  %s1 = inlined_call_operand.vmem [shape: f32[16,128], index: 1, kind: input, shape index: {}]
  %s2 = inlined_call_operand.vmem [shape: f32[1,128], index: 2, kind: input, shape index: {}]
  %s3 = inlined_call_operand.hbm [shape: f32[64,256], index: 3, kind: input, shape index: {}]
  %s4 = inlined_call_operand.vmem [shape: f32[32,128], index: 4, kind: input, shape index: {}]
  %s5 = inlined_call_operand.vmem [shape: f32[1,128], index: 5, kind: input, shape index: {}]
  %s6 = inlined_call_operand.vmem [shape: f32[32,128], index: 6, kind: input, shape index: {}]
  %s7 = inlined_call_operand.vmem [shape: f32[1,128], index: 7, kind: input, shape index: {}]
  %s8 = inlined_call_operand.hbm [shape: f32[8,128], index: 8, kind: output, shape index: {}]
  %s9 = sld [smem:[#allocation0]]
  $region46: #{tpu_custom_call.1} parent=0
    _
  %s11 = ssub.s32 1, %s9
  %s12 = scalar_select 0, %s11, %s9
  $region1: #{tpu_custom_call.1} parent=0
    #allocation2 [shape = 'u8[65536]{0}', space=vmem, size = 0x10000, scoped, tag = 'input window, operand 3, single buffered']
    #allocation3 [shape = 's32[1]{0}', space=sflag, size = 0x4, scoped, tag = 'scoped memory for tpu_custom_call.1']
    #allocation4 [shape = 's32[1]{0}', space=sflag, size = 0x4, scoped, tag = 'scoped memory for tpu_custom_call.1']
    #allocation5 [shape = 'u8[4096]{0}', space=vmem, size = 0x1000, scoped, tag = 'output window, operand 0, single buffered']
    %13 = vsyncpa [#allocation3], 0
    %14 = vsyncpa [#allocation4], 0
    // Predicated region
    $region2: #{tpu_custom_call.1} parent=1 // pred_check
      _
    $region3: #{tpu_custom_call.1} parent=1 // pred_check_branch
      %16 = sbr.rel (0) target = $region5
    $region4: #{tpu_custom_call.1} parent=1 // pred_region
      _
    $region5: #{tpu_custom_call.1} parent=1 // pred_fallthru
      _
    // Predicated region
    $region6: #{tpu_custom_call.1} parent=1 // pred_check
      _
    $region7: #{tpu_custom_call.1} parent=1 // pred_check_branch
      %18 = sbr.rel (0) target = $region9
    $region8: #{tpu_custom_call.1} parent=1 // pred_region
      _
    $region9: #{tpu_custom_call.1} parent=1 // pred_fallthru
      _
    // Predicated region
    $region10: #{tpu_custom_call.1} parent=1 // pred_check
      _
    $region11: #{tpu_custom_call.1} parent=1 // pred_check_branch
      %20 = sbr.rel (0) target = $region13
    $region12: #{tpu_custom_call.1} parent=1 // pred_region
      _
    $region13: #{tpu_custom_call.1} parent=1 // pred_fallthru
      _
    // Predicated region
    $region14: #{tpu_custom_call.1} parent=1 // pred_check
      _
    $region15: #{tpu_custom_call.1} parent=1 // pred_check_branch
      %22 = sbr.rel (0) target = $region17
    $region16: #{tpu_custom_call.1} parent=1 // pred_region
      %s24 = ssub.s32 2048, 2048
      %25 = vsyncadd [#allocation3], %s24
      %s26 = sshll.u32 [#allocation2], 4
      %s27 = int_to_ptr.vmem [resolvable:$true] %s26
      %32 = dma.hbm_to_vmem [thread:$0]  %s3, 2048, %s27, [#allocation3], 256, 256, 16
    $region17: #{tpu_custom_call.1} parent=1 // pred_fallthru
      _
    // Predicated region
    $region18: #{tpu_custom_call.1} parent=1 // pred_check
      _
    $region19: #{tpu_custom_call.1} parent=1 // pred_check_branch
      %34 = sbr.rel (0) target = $region21
    $region20: #{tpu_custom_call.1} parent=1 // pred_region
      _
    $region21: #{tpu_custom_call.1} parent=1 // pred_fallthru
      _
    // Predicated region
    $region22: #{tpu_custom_call.1} parent=1 // pred_check
      _
    $region23: #{tpu_custom_call.1} parent=1 // pred_check_branch
      %36 = sbr.rel (0) target = $region25
    $region24: #{tpu_custom_call.1} parent=1 // pred_region
      _
    $region25: #{tpu_custom_call.1} parent=1 // pred_fallthru
      _
    // Predicated region
    $region26: #{tpu_custom_call.1} parent=1 // pred_check
      _
    $region27: #{tpu_custom_call.1} parent=1 // pred_check_branch
      %38 = sbr.rel (0) target = $region29
    $region28: #{tpu_custom_call.1} parent=1 // pred_region
      _
    $region29: #{tpu_custom_call.1} parent=1 // pred_fallthru
      _
    // Predicated region
    $region30: #{tpu_custom_call.1} parent=1 // pred_check
      _
    $region31: #{tpu_custom_call.1} parent=1 // pred_check_branch
      %40 = sbr.rel (0) target = $region33
    $region32: #{tpu_custom_call.1} parent=1 // pred_region
      _
    $region33: #{tpu_custom_call.1} parent=1 // pred_fallthru
      _
    // Predicated region
    $region34: #{tpu_custom_call.1} parent=1 // pred_check
      _
    $region35: #{tpu_custom_call.1} parent=1 // pred_check_branch
      %42 = sbr.rel (0) target = $region37
    $region36: #{tpu_custom_call.1} parent=1 // pred_region
      %43 = dma.done [#allocation3], 2048
    $region37: #{tpu_custom_call.1} parent=1 // pred_fallthru
      _
    %v44 = vld [vmem:[%s0] sm:$0xff]
    %v45 = vld [vmem:[%s0 + $0x8] sm:$0xff]
    %v46 = vld [vmem:[%s0 + $0x10] sm:$0xff]
    %v47 = vld [vmem:[%s0 + $0x18] sm:$0xff]
    %v48 = vld [vmem:[%s0 + $0x20] sm:$0xff]
    %v49 = vld [vmem:[%s0 + $0x28] sm:$0xff]
    %v50 = vld [vmem:[%s0 + $0x30] sm:$0xff]
    %v51 = vld [vmem:[%s0 + $0x38] sm:$0xff]
    %v52 = vld [vmem:[%s1] sm:$0xff]
    %v53 = vld [vmem:[%s1 + $0x8] sm:$0xff]
    %v54 = vld [vmem:[%s2] sm:$0x1]
    %v56 = vlaneseq
    %v57 = vshrl.u32 %v56, 7
    %v58 = vsub.s32 0, %v57
    %v59 = vrot.slane %v54, %v58
    %vm61 = vcmask 130048
    %v63 = vsel %vm61, %v44, 0
    %v66 = vsel %vm61, %v45, 0
    %v69 = vsel %vm61, %v46, 0
    %v72 = vsel %vm61, %v47, 0
    %v75 = vsel %vm61, %v48, 0
    %v78 = vsel %vm61, %v49, 0
    %v81 = vsel %vm61, %v50, 0
    %v84 = vsel %vm61, %v51, 0
    %86 = vmatprep.subr.mxu0 0.0
    %87 = vmatpush1.msra.mxu0 %v52
    %88 = vmatprep.subr.mxu0 0.0
    %89 = vmatpush1.msra.mxu0 %v53
    %90 = vmatprep.subr.mxu0 0.0
    %91 = vmatpush1.msra.mxu0 0.0
    %92 = vmatprep.subr.mxu0 0.0
    %93 = vmatpush1.msra.mxu0 0.0
    %94 = vmatprep.subr.mxu0 0.0
    %95 = vmatpush1.msra.mxu0 0.0
    %96 = vmatprep.subr.mxu0 0.0
    %97 = vmatpush1.msra.mxu0 0.0
    %98 = vmatprep.subr.mxu0 0.0
    %99 = vmatpush1.msra.mxu0 0.0
    %100 = vmatprep.subr.mxu0 0.0
    %101 = vmatpush1.msra.mxu0 0.0
    %102 = vmatprep.subr.mxu0 0.0
    %103 = vmatpush1.msra.mxu0 0.0
    %104 = vmatprep.subr.mxu0 0.0
    %105 = vmatpush1.msra.mxu0 0.0
    %106 = vmatprep.subr.mxu0 0.0
    %107 = vmatpush1.msra.mxu0 0.0
    %108 = vmatprep.subr.mxu0 0.0
    %109 = vmatpush1.msra.mxu0 0.0
    %110 = vmatprep.subr.mxu0 0.0
    %111 = vmatpush1.msra.mxu0 0.0
    %112 = vmatprep.subr.mxu0 0.0
    %113 = vmatpush1.msra.mxu0 0.0
    %114 = vmatprep.subr.mxu0 0.0
    %115 = vmatpush1.msra.mxu0 0.0
    %116 = vmatprep.subr.mxu0 0.0
    %117 = vmatpush1.msra.mxu0 0.0
    %118 = vmatprep.subr.mxu0 0.0
    %119 = vmatpush1.msra.mxu0 0.0
    %120 = vmatprep.subr.mxu0 0.0
    %121 = vmatpush1.msra.mxu0 0.0
    %122 = vmatprep.subr.mxu0 0.0
    %123 = vmatpush1.msra.mxu0 0.0
    %124 = vmatprep.subr.mxu0 0.0
    %125 = vmatpush1.msra.mxu0 0.0
    %126 = vmatprep.subr.mxu0 0.0
    %127 = vmatpush1.msra.mxu0 0.0
    %128 = vmatprep.subr.mxu0 0.0
    %129 = vmatpush1.msra.mxu0 0.0
    %130 = vmatprep.subr.mxu0 0.0
    %131 = vmatpush1.msra.mxu0 0.0
    %132 = vmatprep.subr.mxu0 0.0
    %133 = vmatpush1.msra.mxu0 0.0
    %134 = vmatprep.subr.mxu0 0.0
    %135 = vmatpush1.msra.mxu0 0.0
    %136 = vmatprep.subr.mxu0 0.0
    %137 = vmatpush1.msra.mxu0 0.0
    %138 = vmatprep.subr.mxu0 0.0
    %139 = vmatpush1.msra.mxu0 0.0
    %140 = vmatprep.subr.mxu0 0.0
    %141 = vmatpush1.msra.mxu0 0.0
    %142 = vmatprep.subr.mxu0 0.0
    %143 = vmatpush1.msra.mxu0 0.0
    %144 = vmatprep.subr.mxu0 0.0
    %145 = vmatpush1.msra.mxu0 0.0
    %146 = vmatprep.subr.mxu0 0.0
    %147 = vmatpush1.msra.mxu0 0.0
    %148 = vmatprep.subr.mxu0 0.0
    %149 = vmatpush1.msra.mxu0 0.0
    %150 = vmatprep.mubr.f32.mxu0 0.0
    %151 = vmatmul.mubr.f32.gmra.mrb[0].mxu0 %v63
    %v152 = vpop.f32.mrb[0].mxu0
    %v153 = vadd.f32 %v59, %v152
    %v154 = vpop.f32.mrb[0].mxu0
    %155 = vmatprep.mubr.f32.mxu0 0.0
    %156 = vmatmul.mubr.f32.gmra.mrb[0].mxu0 %v66
    %v157 = vpop.f32.mrb[0].mxu0
    %v158 = vadd.f32 %v59, %v157
    %v159 = vpop.f32.mrb[0].mxu0
    %160 = vmatprep.mubr.f32.mxu0 0.0
    %161 = vmatmul.mubr.f32.gmra.mrb[0].mxu0 %v69
    %v162 = vpop.f32.mrb[0].mxu0
    %v163 = vadd.f32 %v59, %v162
    %v164 = vpop.f32.mrb[0].mxu0
    %165 = vmatprep.mubr.f32.mxu0 0.0
    %166 = vmatmul.mubr.f32.gmra.mrb[0].mxu0 %v72
    %v167 = vpop.f32.mrb[0].mxu0
    %v168 = vadd.f32 %v59, %v167
    %v169 = vpop.f32.mrb[0].mxu0
    %170 = vmatprep.mubr.f32.mxu0 0.0
    %171 = vmatmul.mubr.f32.gmra.mrb[0].mxu0 %v75
    %v172 = vpop.f32.mrb[0].mxu0
    %v173 = vadd.f32 %v59, %v172
    %v174 = vpop.f32.mrb[0].mxu0
    %175 = vmatprep.mubr.f32.mxu0 0.0
    %176 = vmatmul.mubr.f32.gmra.mrb[0].mxu0 %v78
    %v177 = vpop.f32.mrb[0].mxu0
    %v178 = vadd.f32 %v59, %v177
    %v179 = vpop.f32.mrb[0].mxu0
    %180 = vmatprep.mubr.f32.mxu0 0.0
    %181 = vmatmul.mubr.f32.gmra.mrb[0].mxu0 %v81
    %v182 = vpop.f32.mrb[0].mxu0
    %v183 = vadd.f32 %v59, %v182
    %v184 = vpop.f32.mrb[0].mxu0
    %185 = vmatprep.mubr.f32.mxu0 0.0
    %186 = vmatmul.mubr.f32.gmra.mrb[0].mxu0 %v84
    %v187 = vpop.f32.mrb[0].mxu0
    %v188 = vadd.f32 %v59, %v187
    %v189 = vpop.f32.mrb[0].mxu0
    %190 = vdwg.mxu0
    %v191 = vld [vmem:[#allocation2] sm:$0xff]
    %v192 = vld [vmem:[#allocation2 + $0x8] sm:$0xff]
    %v193 = vld [vmem:[#allocation2 + $0x10] sm:$0xff]
    %v194 = vld [vmem:[#allocation2 + $0x18] sm:$0xff]
    %v195 = vld [vmem:[#allocation2 + $0x20] sm:$0xff]
    %v196 = vld [vmem:[#allocation2 + $0x28] sm:$0xff]
    %v197 = vld [vmem:[#allocation2 + $0x30] sm:$0xff]
    %v198 = vld [vmem:[#allocation2 + $0x38] sm:$0xff]
    %v199 = vld [vmem:[#allocation2 + $0x40] sm:$0xff]
    %v200 = vld [vmem:[#allocation2 + $0x48] sm:$0xff]
    %v201 = vld [vmem:[#allocation2 + $0x50] sm:$0xff]
    %v202 = vld [vmem:[#allocation2 + $0x58] sm:$0xff]
    %v203 = vld [vmem:[#allocation2 + $0x60] sm:$0xff]
    %v204 = vld [vmem:[#allocation2 + $0x68] sm:$0xff]
    %v205 = vld [vmem:[#allocation2 + $0x70] sm:$0xff]
    %v206 = vld [vmem:[#allocation2 + $0x78] sm:$0xff]
    %v207 = vld [vmem:[%s4] sm:$0xff]
    %v208 = vld [vmem:[%s4 + $0x8] sm:$0xff]
    %v209 = vld [vmem:[%s4 + $0x10] sm:$0xff]
    %v210 = vld [vmem:[%s4 + $0x18] sm:$0xff]
    %v211 = vld [vmem:[%s5] sm:$0x1]
    %v213 = vlaneseq
    %v214 = vshrl.u32 %v213, 7
    %v215 = vsub.s32 0, %v214
    %v216 = vrot.slane %v211, %v215
    %v218 = vxor.u32 %v153, 2147483648
    %v219 = vmul.f32 %v218, 1.442695
    %v220 = vpow.pop %v219
    %v221 = vadd.f32 %v220, 1.0
    %v222 = vrcp.pop %v221
    %v223 = vmul.f32 1.0, %v222
    %v224 = vtanh.pop %v153
    %v225 = vmul.f32 %v223, 0.0
    %227 = vrot.lane.b32.xlu0 %v224, 64
    %v228 = vpop.permute.xlu0 %227
    %v230 = vmul.f32 %v223, %v228
    %232 = vrot.lane.b32.xlu0 %v230, 32
    %v233 = vpop.permute.xlu0 %232
    %v235 = vadd.f32 %v225, %v233
    %v236 = vtanh.pop %v235
    %238 = vrot.lane.b32.xlu0 %v236, 64
    %v239 = vpop.permute.xlu0 %238
    %v241 = vmul.f32 %v223, %v239
    %243 = vrot.lane.b32.xlu0 %v241, 32
    %v244 = vpop.permute.xlu0 %243
    %vm245 = vcmask 261120
    %v246 = vsel %vm245, %v244, 0
    %248 = vmatprep.subr.mxu0 0.0
    %249 = vmatpush1.msra.mxu0 %v207
    %250 = vmatprep.subr.mxu0 0.0
    %251 = vmatpush1.msra.mxu0 %v208
    %252 = vmatprep.subr.mxu0 0.0
    %253 = vmatpush1.msra.mxu0 %v209
    %254 = vmatprep.subr.mxu0 0.0
    %255 = vmatpush1.msra.mxu0 %v210
    %256 = vmatprep.subr.mxu0 0.0
    %257 = vmatpush1.msra.mxu0 0.0
    %258 = vmatprep.subr.mxu0 0.0
    %259 = vmatpush1.msra.mxu0 0.0
    %260 = vmatprep.subr.mxu0 0.0
    %261 = vmatpush1.msra.mxu0 0.0
    %262 = vmatprep.subr.mxu0 0.0
    %263 = vmatpush1.msra.mxu0 0.0
    %264 = vmatprep.subr.mxu0 0.0
    %265 = vmatpush1.msra.mxu0 0.0
    %266 = vmatprep.subr.mxu0 0.0
    %267 = vmatpush1.msra.mxu0 0.0
    %268 = vmatprep.subr.mxu0 0.0
    %269 = vmatpush1.msra.mxu0 0.0
    %270 = vmatprep.subr.mxu0 0.0
    %271 = vmatpush1.msra.mxu0 0.0
    %272 = vmatprep.subr.mxu0 0.0
    %273 = vmatpush1.msra.mxu0 0.0
    %274 = vmatprep.subr.mxu0 0.0
    %275 = vmatpush1.msra.mxu0 0.0
    %276 = vmatprep.subr.mxu0 0.0
    %277 = vmatpush1.msra.mxu0 0.0
    %278 = vmatprep.subr.mxu0 0.0
    %279 = vmatpush1.msra.mxu0 0.0
    %280 = vmatprep.subr.mxu0 0.0
    %281 = vmatpush1.msra.mxu0 0.0
    %282 = vmatprep.subr.mxu0 0.0
    %283 = vmatpush1.msra.mxu0 0.0
    %284 = vmatprep.subr.mxu0 0.0
    %285 = vmatpush1.msra.mxu0 0.0
    %286 = vmatprep.subr.mxu0 0.0
    %287 = vmatpush1.msra.mxu0 0.0
    %288 = vmatprep.subr.mxu0 0.0
    %289 = vmatpush1.msra.mxu0 0.0
    %290 = vmatprep.subr.mxu0 0.0
    %291 = vmatpush1.msra.mxu0 0.0
    %292 = vmatprep.subr.mxu0 0.0
    %293 = vmatpush1.msra.mxu0 0.0
    %294 = vmatprep.subr.mxu0 0.0
    %295 = vmatpush1.msra.mxu0 0.0
    %296 = vmatprep.subr.mxu0 0.0
    %297 = vmatpush1.msra.mxu0 0.0
    %298 = vmatprep.subr.mxu0 0.0
    %299 = vmatpush1.msra.mxu0 0.0
    %300 = vmatprep.subr.mxu0 0.0
    %301 = vmatpush1.msra.mxu0 0.0
    %302 = vmatprep.subr.mxu0 0.0
    %303 = vmatpush1.msra.mxu0 0.0
    %304 = vmatprep.subr.mxu0 0.0
    %305 = vmatpush1.msra.mxu0 0.0
    %306 = vmatprep.subr.mxu0 0.0
    %307 = vmatpush1.msra.mxu0 0.0
    %308 = vmatprep.subr.mxu0 0.0
    %309 = vmatpush1.msra.mxu0 0.0
    %310 = vmatprep.subr.mxu0 0.0
    %311 = vmatpush1.msra.mxu0 0.0
    %312 = vmatprep.mubr.f32.mxu0 0.0
    %313 = vmatmul.mubr.f32.gmra.mrb[0].mxu0 %v246
    %v314 = vpop.f32.mrb[0].mxu0
    %v315 = vadd.f32 %v216, %v314
    %v316 = vpop.f32.mrb[0].mxu0
    %317 = vdwg.mxu0
    %v318 = vxor.u32 %v315, 2147483648
    %v319 = vmul.f32 %v318, 1.442695
    %v320 = vpow.pop %v319
    %v321 = vadd.f32 %v320, 1.0
    %v322 = vrcp.pop %v321
    %v323 = vmul.f32 1.0, %v322
    %v324 = vtanh.pop %v315
    %v325 = vmul.f32 %v323, 0.0
    %327 = vrot.lane.b32.xlu0 %v324, 64
    %v328 = vpop.permute.xlu0 %327
    %v330 = vmul.f32 %v323, %v328
    %332 = vrot.lane.b32.xlu0 %v330, 32
    %v333 = vpop.permute.xlu0 %332
    %v335 = vadd.f32 %v325, %v333
    %v336 = vtanh.pop %v335
    %338 = vrot.lane.b32.xlu0 %v336, 64
    %v339 = vpop.permute.xlu0 %338
    %v341 = vmul.f32 %v323, %v339
    %344 = vrot.lane.b32.xlu0 %v341, 64
    %v345 = vpop.permute.xlu0 %344
    %v347 = vsel %vm245, %v244, %v345
    %vm348 = vcmask 523264
    %v350 = vsel %vm348, %v347, 0
    %352 = vmatprep.subr.mxu0 %v192
    %353 = vmatpush1.msra.mxu0 %v191
    %354 = vmatprep.subr.mxu0 %v194
    %355 = vmatpush1.msra.mxu0 %v193
    %356 = vmatprep.subr.mxu0 %v196
    %357 = vmatpush1.msra.mxu0 %v195
    %358 = vmatprep.subr.mxu0 %v198
    %359 = vmatpush1.msra.mxu0 %v197
    %360 = vmatprep.subr.mxu0 %v200
    %361 = vmatpush1.msra.mxu0 %v199
    %362 = vmatprep.subr.mxu0 %v202
    %363 = vmatpush1.msra.mxu0 %v201
    %364 = vmatprep.subr.mxu0 %v204
    %365 = vmatpush1.msra.mxu0 %v203
    %366 = vmatprep.subr.mxu0 %v206
    %367 = vmatpush1.msra.mxu0 %v205
    %368 = vmatprep.subr.mxu0 0.0
    %369 = vmatpush1.msra.mxu0 0.0
    %370 = vmatprep.subr.mxu0 0.0
    %371 = vmatpush1.msra.mxu0 0.0
    %372 = vmatprep.subr.mxu0 0.0
    %373 = vmatpush1.msra.mxu0 0.0
    %374 = vmatprep.subr.mxu0 0.0
    %375 = vmatpush1.msra.mxu0 0.0
    %376 = vmatprep.subr.mxu0 0.0
    %377 = vmatpush1.msra.mxu0 0.0
    %378 = vmatprep.subr.mxu0 0.0
    %379 = vmatpush1.msra.mxu0 0.0
    %380 = vmatprep.subr.mxu0 0.0
    %381 = vmatpush1.msra.mxu0 0.0
    %382 = vmatprep.subr.mxu0 0.0
    %383 = vmatpush1.msra.mxu0 0.0
    %384 = vmatprep.subr.mxu0 0.0
    %385 = vmatpush1.msra.mxu0 0.0
    %386 = vmatprep.subr.mxu0 0.0
    %387 = vmatpush1.msra.mxu0 0.0
    %388 = vmatprep.subr.mxu0 0.0
    %389 = vmatpush1.msra.mxu0 0.0
    %390 = vmatprep.subr.mxu0 0.0
    %391 = vmatpush1.msra.mxu0 0.0
    %392 = vmatprep.subr.mxu0 0.0
    %393 = vmatpush1.msra.mxu0 0.0
    %394 = vmatprep.subr.mxu0 0.0
    %395 = vmatpush1.msra.mxu0 0.0
    %396 = vmatprep.subr.mxu0 0.0
    %397 = vmatpush1.msra.mxu0 0.0
    %398 = vmatprep.subr.mxu0 0.0
    %399 = vmatpush1.msra.mxu0 0.0
    %400 = vmatprep.subr.mxu0 0.0
    %401 = vmatpush1.msra.mxu0 0.0
    %402 = vmatprep.subr.mxu0 0.0
    %403 = vmatpush1.msra.mxu0 0.0
    %404 = vmatprep.subr.mxu0 0.0
    %405 = vmatpush1.msra.mxu0 0.0
    %406 = vmatprep.subr.mxu0 0.0
    %407 = vmatpush1.msra.mxu0 0.0
    %408 = vmatprep.subr.mxu0 0.0
    %409 = vmatpush1.msra.mxu0 0.0
    %410 = vmatprep.subr.mxu0 0.0
    %411 = vmatpush1.msra.mxu0 0.0
    %412 = vmatprep.subr.mxu0 0.0
    %413 = vmatpush1.msra.mxu0 0.0
    %414 = vmatprep.subr.mxu0 0.0
    %415 = vmatpush1.msra.mxu0 0.0
    %416 = vmatprep.mubr.f32.mxu0 0.0
    %417 = vmatmul.mubr.f32.gmra.mrb[0].mxu0 %v350
    %v418 = vpop.f32.mrb[0].mxu0
    %v419 = vadd.f32 0.0, %v418
    %v420 = vpop.f32.mrb[0].mxu0
    %v421 = vadd.f32 0.0, %v420
    %422 = vdwg.mxu0
    %v423 = vadd.f32 %v158, %v419
    %v424 = vxor.u32 %v423, 2147483648
    %v425 = vmul.f32 %v424, 1.442695
    %v426 = vpow.pop %v425
    %v427 = vadd.f32 %v426, 1.0
    %v428 = vrcp.pop %v427
    %v429 = vmul.f32 1.0, %v428
    %v430 = vtanh.pop %v423
    %v431 = vmul.f32 %v429, %v235
    %433 = vrot.lane.b32.xlu0 %v430, 64
    %v434 = vpop.permute.xlu0 %433
    %v436 = vmul.f32 %v429, %v434
    %438 = vrot.lane.b32.xlu0 %v436, 32
    %v439 = vpop.permute.xlu0 %438
    %v441 = vadd.f32 %v431, %v439
    %v442 = vtanh.pop %v441
    %444 = vrot.lane.b32.xlu0 %v442, 64
    %v445 = vpop.permute.xlu0 %444
    %v447 = vmul.f32 %v429, %v445
    %449 = vrot.lane.b32.xlu0 %v447, 32
    %v450 = vpop.permute.xlu0 %449
    %v451 = vsel %vm245, %v450, 0
    %453 = vmatprep.subr.mxu0 0.0
    %454 = vmatpush1.msra.mxu0 %v207
    %455 = vmatprep.subr.mxu0 0.0
    %456 = vmatpush1.msra.mxu0 %v208
    %457 = vmatprep.subr.mxu0 0.0
    %458 = vmatpush1.msra.mxu0 %v209
    %459 = vmatprep.subr.mxu0 0.0
    %460 = vmatpush1.msra.mxu0 %v210
    %461 = vmatprep.subr.mxu0 0.0
    %462 = vmatpush1.msra.mxu0 0.0
    %463 = vmatprep.subr.mxu0 0.0
    %464 = vmatpush1.msra.mxu0 0.0
    %465 = vmatprep.subr.mxu0 0.0
    %466 = vmatpush1.msra.mxu0 0.0
    %467 = vmatprep.subr.mxu0 0.0
    %468 = vmatpush1.msra.mxu0 0.0
    %469 = vmatprep.subr.mxu0 0.0
    %470 = vmatpush1.msra.mxu0 0.0
    %471 = vmatprep.subr.mxu0 0.0
    %472 = vmatpush1.msra.mxu0 0.0
    %473 = vmatprep.subr.mxu0 0.0
    %474 = vmatpush1.msra.mxu0 0.0
    %475 = vmatprep.subr.mxu0 0.0
    %476 = vmatpush1.msra.mxu0 0.0
    %477 = vmatprep.subr.mxu0 0.0
    %478 = vmatpush1.msra.mxu0 0.0
    %479 = vmatprep.subr.mxu0 0.0
    %480 = vmatpush1.msra.mxu0 0.0
    %481 = vmatprep.subr.mxu0 0.0
    %482 = vmatpush1.msra.mxu0 0.0
    %483 = vmatprep.subr.mxu0 0.0
    %484 = vmatpush1.msra.mxu0 0.0
    %485 = vmatprep.subr.mxu0 0.0
    %486 = vmatpush1.msra.mxu0 0.0
    %487 = vmatprep.subr.mxu0 0.0
    %488 = vmatpush1.msra.mxu0 0.0
    %489 = vmatprep.subr.mxu0 0.0
    %490 = vmatpush1.msra.mxu0 0.0
    %491 = vmatprep.subr.mxu0 0.0
    %492 = vmatpush1.msra.mxu0 0.0
    %493 = vmatprep.subr.mxu0 0.0
    %494 = vmatpush1.msra.mxu0 0.0
    %495 = vmatprep.subr.mxu0 0.0
    %496 = vmatpush1.msra.mxu0 0.0
    %497 = vmatprep.subr.mxu0 0.0
    %498 = vmatpush1.msra.mxu0 0.0
    %499 = vmatprep.subr.mxu0 0.0
    %500 = vmatpush1.msra.mxu0 0.0
    %501 = vmatprep.subr.mxu0 0.0
    %502 = vmatpush1.msra.mxu0 0.0
    %503 = vmatprep.subr.mxu0 0.0
    %504 = vmatpush1.msra.mxu0 0.0
    %505 = vmatprep.subr.mxu0 0.0
    %506 = vmatpush1.msra.mxu0 0.0
    %507 = vmatprep.subr.mxu0 0.0
    %508 = vmatpush1.msra.mxu0 0.0
    %509 = vmatprep.subr.mxu0 0.0
    %510 = vmatpush1.msra.mxu0 0.0
    %511 = vmatprep.subr.mxu0 0.0
    %512 = vmatpush1.msra.mxu0 0.0
    %513 = vmatprep.subr.mxu0 0.0
    %514 = vmatpush1.msra.mxu0 0.0
    %515 = vmatprep.subr.mxu0 0.0
    %516 = vmatpush1.msra.mxu0 0.0
    %517 = vmatprep.mubr.f32.mxu0 0.0
    %518 = vmatmul.mubr.f32.gmra.mrb[0].mxu0 %v451
    %v519 = vpop.f32.mrb[0].mxu0
    %v520 = vadd.f32 %v421, %v519
    %v521 = vpop.f32.mrb[0].mxu0
    %522 = vdwg.mxu0
    %v523 = vadd.f32 %v520, %v216
    %v524 = vxor.u32 %v523, 2147483648
    %v525 = vmul.f32 %v524, 1.442695
    %v526 = vpow.pop %v525
    %v527 = vadd.f32 %v526, 1.0
    %v528 = vrcp.pop %v527
    %v529 = vmul.f32 1.0, %v528
    %v530 = vtanh.pop %v523
    %v531 = vmul.f32 %v529, %v335
    %533 = vrot.lane.b32.xlu0 %v530, 64
    %v534 = vpop.permute.xlu0 %533
    %v536 = vmul.f32 %v529, %v534
    %538 = vrot.lane.b32.xlu0 %v536, 32
    %v539 = vpop.permute.xlu0 %538
    %v541 = vadd.f32 %v531, %v539
    %v542 = vtanh.pop %v541
    %544 = vrot.lane.b32.xlu0 %v542, 64
    %v545 = vpop.permute.xlu0 %544
    %v547 = vmul.f32 %v529, %v545
    %550 = vrot.lane.b32.xlu0 %v547, 64
    %v551 = vpop.permute.xlu0 %550
    %v553 = vsel %vm245, %v450, %v551
    %v555 = vsel %vm348, %v553, 0
    %557 = vmatprep.subr.mxu0 %v192
    %558 = vmatpush1.msra.mxu0 %v191
    %559 = vmatprep.subr.mxu0 %v194
    %560 = vmatpush1.msra.mxu0 %v193
    %561 = vmatprep.subr.mxu0 %v196
    %562 = vmatpush1.msra.mxu0 %v195
    %563 = vmatprep.subr.mxu0 %v198
    %564 = vmatpush1.msra.mxu0 %v197
    %565 = vmatprep.subr.mxu0 %v200
    %566 = vmatpush1.msra.mxu0 %v199
    %567 = vmatprep.subr.mxu0 %v202
    %568 = vmatpush1.msra.mxu0 %v201
    %569 = vmatprep.subr.mxu0 %v204
    %570 = vmatpush1.msra.mxu0 %v203
    %571 = vmatprep.subr.mxu0 %v206
    %572 = vmatpush1.msra.mxu0 %v205
    %573 = vmatprep.subr.mxu0 0.0
    %574 = vmatpush1.msra.mxu0 0.0
    %575 = vmatprep.subr.mxu0 0.0
    %576 = vmatpush1.msra.mxu0 0.0
    %577 = vmatprep.subr.mxu0 0.0
    %578 = vmatpush1.msra.mxu0 0.0
    %579 = vmatprep.subr.mxu0 0.0
    %580 = vmatpush1.msra.mxu0 0.0
    %581 = vmatprep.subr.mxu0 0.0
    %582 = vmatpush1.msra.mxu0 0.0
    %583 = vmatprep.subr.mxu0 0.0
    %584 = vmatpush1.msra.mxu0 0.0
    %585 = vmatprep.subr.mxu0 0.0
    %586 = vmatpush1.msra.mxu0 0.0
    %587 = vmatprep.subr.mxu0 0.0
    %588 = vmatpush1.msra.mxu0 0.0
    %589 = vmatprep.subr.mxu0 0.0
    %590 = vmatpush1.msra.mxu0 0.0
    %591 = vmatprep.subr.mxu0 0.0
    %592 = vmatpush1.msra.mxu0 0.0
    %593 = vmatprep.subr.mxu0 0.0
    %594 = vmatpush1.msra.mxu0 0.0
    %595 = vmatprep.subr.mxu0 0.0
    %596 = vmatpush1.msra.mxu0 0.0
    %597 = vmatprep.subr.mxu0 0.0
    %598 = vmatpush1.msra.mxu0 0.0
    %599 = vmatprep.subr.mxu0 0.0
    %600 = vmatpush1.msra.mxu0 0.0
    %601 = vmatprep.subr.mxu0 0.0
    %602 = vmatpush1.msra.mxu0 0.0
    %603 = vmatprep.subr.mxu0 0.0
    %604 = vmatpush1.msra.mxu0 0.0
    %605 = vmatprep.subr.mxu0 0.0
    %606 = vmatpush1.msra.mxu0 0.0
    %607 = vmatprep.subr.mxu0 0.0
    %608 = vmatpush1.msra.mxu0 0.0
    %609 = vmatprep.subr.mxu0 0.0
    %610 = vmatpush1.msra.mxu0 0.0
    %611 = vmatprep.subr.mxu0 0.0
    %612 = vmatpush1.msra.mxu0 0.0
    %613 = vmatprep.subr.mxu0 0.0
    %614 = vmatpush1.msra.mxu0 0.0
    %615 = vmatprep.subr.mxu0 0.0
    %616 = vmatpush1.msra.mxu0 0.0
    %617 = vmatprep.subr.mxu0 0.0
    %618 = vmatpush1.msra.mxu0 0.0
    %619 = vmatprep.subr.mxu0 0.0
    %620 = vmatpush1.msra.mxu0 0.0
    %621 = vmatprep.mubr.f32.mxu0 0.0
    %622 = vmatmul.mubr.f32.gmra.mrb[0].mxu0 %v555
    %v623 = vpop.f32.mrb[0].mxu0
    %v624 = vadd.f32 0.0, %v623
    %v625 = vpop.f32.mrb[0].mxu0
    %v626 = vadd.f32 0.0, %v625
    %627 = vdwg.mxu0
    %v628 = vadd.f32 %v163, %v624
    %v629 = vxor.u32 %v628, 2147483648
    %v630 = vmul.f32 %v629, 1.442695
    %v631 = vpow.pop %v630
    %v632 = vadd.f32 %v631, 1.0
    %v633 = vrcp.pop %v632
    %v634 = vmul.f32 1.0, %v633
    %v635 = vtanh.pop %v628
    %v636 = vmul.f32 %v634, %v441
    %638 = vrot.lane.b32.xlu0 %v635, 64
    %v639 = vpop.permute.xlu0 %638
    %v641 = vmul.f32 %v634, %v639
    %643 = vrot.lane.b32.xlu0 %v641, 32
    %v644 = vpop.permute.xlu0 %643
    %v646 = vadd.f32 %v636, %v644
    %v647 = vtanh.pop %v646
    %649 = vrot.lane.b32.xlu0 %v647, 64
    %v650 = vpop.permute.xlu0 %649
    %v652 = vmul.f32 %v634, %v650
    %654 = vrot.lane.b32.xlu0 %v652, 32
    %v655 = vpop.permute.xlu0 %654
    %v656 = vsel %vm245, %v655, 0
    %658 = vmatprep.subr.mxu0 0.0
    %659 = vmatpush1.msra.mxu0 %v207
    %660 = vmatprep.subr.mxu0 0.0
    %661 = vmatpush1.msra.mxu0 %v208
    %662 = vmatprep.subr.mxu0 0.0
    %663 = vmatpush1.msra.mxu0 %v209
    %664 = vmatprep.subr.mxu0 0.0
    %665 = vmatpush1.msra.mxu0 %v210
    %666 = vmatprep.subr.mxu0 0.0
    %667 = vmatpush1.msra.mxu0 0.0
    %668 = vmatprep.subr.mxu0 0.0
    %669 = vmatpush1.msra.mxu0 0.0
    %670 = vmatprep.subr.mxu0 0.0
    %671 = vmatpush1.msra.mxu0 0.0
    %672 = vmatprep.subr.mxu0 0.0
    %673 = vmatpush1.msra.mxu0 0.0
    %674 = vmatprep.subr.mxu0 0.0
    %675 = vmatpush1.msra.mxu0 0.0
    %676 = vmatprep.subr.mxu0 0.0
    %677 = vmatpush1.msra.mxu0 0.0
    %678 = vmatprep.subr.mxu0 0.0
    %679 = vmatpush1.msra.mxu0 0.0
    %680 = vmatprep.subr.mxu0 0.0
    %681 = vmatpush1.msra.mxu0 0.0
    %682 = vmatprep.subr.mxu0 0.0
    %683 = vmatpush1.msra.mxu0 0.0
    %684 = vmatprep.subr.mxu0 0.0
    %685 = vmatpush1.msra.mxu0 0.0
    %686 = vmatprep.subr.mxu0 0.0
    %687 = vmatpush1.msra.mxu0 0.0
    %688 = vmatprep.subr.mxu0 0.0
    %689 = vmatpush1.msra.mxu0 0.0
    %690 = vmatprep.subr.mxu0 0.0
    %691 = vmatpush1.msra.mxu0 0.0
    %692 = vmatprep.subr.mxu0 0.0
    %693 = vmatpush1.msra.mxu0 0.0
    %694 = vmatprep.subr.mxu0 0.0
    %695 = vmatpush1.msra.mxu0 0.0
    %696 = vmatprep.subr.mxu0 0.0
    %697 = vmatpush1.msra.mxu0 0.0
    %698 = vmatprep.subr.mxu0 0.0
    %699 = vmatpush1.msra.mxu0 0.0
    %700 = vmatprep.subr.mxu0 0.0
    %701 = vmatpush1.msra.mxu0 0.0
    %702 = vmatprep.subr.mxu0 0.0
    %703 = vmatpush1.msra.mxu0 0.0
    %704 = vmatprep.subr.mxu0 0.0
    %705 = vmatpush1.msra.mxu0 0.0
    %706 = vmatprep.subr.mxu0 0.0
    %707 = vmatpush1.msra.mxu0 0.0
    %708 = vmatprep.subr.mxu0 0.0
    %709 = vmatpush1.msra.mxu0 0.0
    %710 = vmatprep.subr.mxu0 0.0
    %711 = vmatpush1.msra.mxu0 0.0
    %712 = vmatprep.subr.mxu0 0.0
    %713 = vmatpush1.msra.mxu0 0.0
    %714 = vmatprep.subr.mxu0 0.0
    %715 = vmatpush1.msra.mxu0 0.0
    %716 = vmatprep.subr.mxu0 0.0
    %717 = vmatpush1.msra.mxu0 0.0
    %718 = vmatprep.subr.mxu0 0.0
    %719 = vmatpush1.msra.mxu0 0.0
    %720 = vmatprep.subr.mxu0 0.0
    %721 = vmatpush1.msra.mxu0 0.0
    %722 = vmatprep.mubr.f32.mxu0 0.0
    %723 = vmatmul.mubr.f32.gmra.mrb[0].mxu0 %v656
    %v724 = vpop.f32.mrb[0].mxu0
    %v725 = vadd.f32 %v626, %v724
    %v726 = vpop.f32.mrb[0].mxu0
    %727 = vdwg.mxu0
    %v728 = vadd.f32 %v725, %v216
    %v729 = vxor.u32 %v728, 2147483648
    %v730 = vmul.f32 %v729, 1.442695
    %v731 = vpow.pop %v730
    %v732 = vadd.f32 %v731, 1.0
    %v733 = vrcp.pop %v732
    %v734 = vmul.f32 1.0, %v733
    %v735 = vtanh.pop %v728
    %v736 = vmul.f32 %v734, %v541
    %738 = vrot.lane.b32.xlu0 %v735, 64
    %v739 = vpop.permute.xlu0 %738
    %v741 = vmul.f32 %v734, %v739
    %743 = vrot.lane.b32.xlu0 %v741, 32
    %v744 = vpop.permute.xlu0 %743
    %v746 = vadd.f32 %v736, %v744
    %v747 = vtanh.pop %v746
    %749 = vrot.lane.b32.xlu0 %v747, 64
    %v750 = vpop.permute.xlu0 %749
    %v752 = vmul.f32 %v734, %v750
    %755 = vrot.lane.b32.xlu0 %v752, 64
    %v756 = vpop.permute.xlu0 %755
    %v758 = vsel %vm245, %v655, %v756
    %v760 = vsel %vm348, %v758, 0
    %762 = vmatprep.subr.mxu0 %v192
    %763 = vmatpush1.msra.mxu0 %v191
    %764 = vmatprep.subr.mxu0 %v194
    %765 = vmatpush1.msra.mxu0 %v193
    %766 = vmatprep.subr.mxu0 %v196
    %767 = vmatpush1.msra.mxu0 %v195
    %768 = vmatprep.subr.mxu0 %v198
    %769 = vmatpush1.msra.mxu0 %v197
    %770 = vmatprep.subr.mxu0 %v200
    %771 = vmatpush1.msra.mxu0 %v199
    %772 = vmatprep.subr.mxu0 %v202
    %773 = vmatpush1.msra.mxu0 %v201
    %774 = vmatprep.subr.mxu0 %v204
    %775 = vmatpush1.msra.mxu0 %v203
    %776 = vmatprep.subr.mxu0 %v206
    %777 = vmatpush1.msra.mxu0 %v205
    %778 = vmatprep.subr.mxu0 0.0
    %779 = vmatpush1.msra.mxu0 0.0
    %780 = vmatprep.subr.mxu0 0.0
    %781 = vmatpush1.msra.mxu0 0.0
    %782 = vmatprep.subr.mxu0 0.0
    %783 = vmatpush1.msra.mxu0 0.0
    %784 = vmatprep.subr.mxu0 0.0
    %785 = vmatpush1.msra.mxu0 0.0
    %786 = vmatprep.subr.mxu0 0.0
    %787 = vmatpush1.msra.mxu0 0.0
    %788 = vmatprep.subr.mxu0 0.0
    %789 = vmatpush1.msra.mxu0 0.0
    %790 = vmatprep.subr.mxu0 0.0
    %791 = vmatpush1.msra.mxu0 0.0
    %792 = vmatprep.subr.mxu0 0.0
    %793 = vmatpush1.msra.mxu0 0.0
    %794 = vmatprep.subr.mxu0 0.0
    %795 = vmatpush1.msra.mxu0 0.0
    %796 = vmatprep.subr.mxu0 0.0
    %797 = vmatpush1.msra.mxu0 0.0
    %798 = vmatprep.subr.mxu0 0.0
    %799 = vmatpush1.msra.mxu0 0.0
    %800 = vmatprep.subr.mxu0 0.0
    %801 = vmatpush1.msra.mxu0 0.0
    %802 = vmatprep.subr.mxu0 0.0
    %803 = vmatpush1.msra.mxu0 0.0
    %804 = vmatprep.subr.mxu0 0.0
    %805 = vmatpush1.msra.mxu0 0.0
    %806 = vmatprep.subr.mxu0 0.0
    %807 = vmatpush1.msra.mxu0 0.0
    %808 = vmatprep.subr.mxu0 0.0
    %809 = vmatpush1.msra.mxu0 0.0
    %810 = vmatprep.subr.mxu0 0.0
    %811 = vmatpush1.msra.mxu0 0.0
    %812 = vmatprep.subr.mxu0 0.0
    %813 = vmatpush1.msra.mxu0 0.0
    %814 = vmatprep.subr.mxu0 0.0
    %815 = vmatpush1.msra.mxu0 0.0
    %816 = vmatprep.subr.mxu0 0.0
    %817 = vmatpush1.msra.mxu0 0.0
    %818 = vmatprep.subr.mxu0 0.0
    %819 = vmatpush1.msra.mxu0 0.0
    %820 = vmatprep.subr.mxu0 0.0
    %821 = vmatpush1.msra.mxu0 0.0
    %822 = vmatprep.subr.mxu0 0.0
    %823 = vmatpush1.msra.mxu0 0.0
    %824 = vmatprep.subr.mxu0 0.0
    %825 = vmatpush1.msra.mxu0 0.0
    %826 = vmatprep.mubr.f32.mxu0 0.0
    %827 = vmatmul.mubr.f32.gmra.mrb[0].mxu0 %v760
    %v828 = vpop.f32.mrb[0].mxu0
    %v829 = vadd.f32 0.0, %v828
    %v830 = vpop.f32.mrb[0].mxu0
    %v831 = vadd.f32 0.0, %v830
    %832 = vdwg.mxu0
    %v833 = vadd.f32 %v168, %v829
    %v834 = vxor.u32 %v833, 2147483648
    %v835 = vmul.f32 %v834, 1.442695
    %v836 = vpow.pop %v835
    %v837 = vadd.f32 %v836, 1.0
    %v838 = vrcp.pop %v837
    %v839 = vmul.f32 1.0, %v838
    %v840 = vtanh.pop %v833
    %v841 = vmul.f32 %v839, %v646
    %843 = vrot.lane.b32.xlu0 %v840, 64
    %v844 = vpop.permute.xlu0 %843
    %v846 = vmul.f32 %v839, %v844
    %848 = vrot.lane.b32.xlu0 %v846, 32
    %v849 = vpop.permute.xlu0 %848
    %v851 = vadd.f32 %v841, %v849
    %v852 = vtanh.pop %v851
    %854 = vrot.lane.b32.xlu0 %v852, 64
    %v855 = vpop.permute.xlu0 %854
    %v857 = vmul.f32 %v839, %v855
    %859 = vrot.lane.b32.xlu0 %v857, 32
    %v860 = vpop.permute.xlu0 %859
    %v861 = vsel %vm245, %v860, 0
    %863 = vmatprep.subr.mxu0 0.0
    %864 = vmatpush1.msra.mxu0 %v207
    %865 = vmatprep.subr.mxu0 0.0
    %866 = vmatpush1.msra.mxu0 %v208
    %867 = vmatprep.subr.mxu0 0.0
    %868 = vmatpush1.msra.mxu0 %v209
    %869 = vmatprep.subr.mxu0 0.0
    %870 = vmatpush1.msra.mxu0 %v210
    %871 = vmatprep.subr.mxu0 0.0
    %872 = vmatpush1.msra.mxu0 0.0
    %873 = vmatprep.subr.mxu0 0.0
    %874 = vmatpush1.msra.mxu0 0.0
    %875 = vmatprep.subr.mxu0 0.0
    %876 = vmatpush1.msra.mxu0 0.0
    %877 = vmatprep.subr.mxu0 0.0
    %878 = vmatpush1.msra.mxu0 0.0
    %879 = vmatprep.subr.mxu0 0.0
    %880 = vmatpush1.msra.mxu0 0.0
    %881 = vmatprep.subr.mxu0 0.0
    %882 = vmatpush1.msra.mxu0 0.0
    %883 = vmatprep.subr.mxu0 0.0
    %884 = vmatpush1.msra.mxu0 0.0
    %885 = vmatprep.subr.mxu0 0.0
    %886 = vmatpush1.msra.mxu0 0.0
    %887 = vmatprep.subr.mxu0 0.0
    %888 = vmatpush1.msra.mxu0 0.0
    %889 = vmatprep.subr.mxu0 0.0
    %890 = vmatpush1.msra.mxu0 0.0
    %891 = vmatprep.subr.mxu0 0.0
    %892 = vmatpush1.msra.mxu0 0.0
    %893 = vmatprep.subr.mxu0 0.0
    %894 = vmatpush1.msra.mxu0 0.0
    %895 = vmatprep.subr.mxu0 0.0
    %896 = vmatpush1.msra.mxu0 0.0
    %897 = vmatprep.subr.mxu0 0.0
    %898 = vmatpush1.msra.mxu0 0.0
    %899 = vmatprep.subr.mxu0 0.0
    %900 = vmatpush1.msra.mxu0 0.0
    %901 = vmatprep.subr.mxu0 0.0
    %902 = vmatpush1.msra.mxu0 0.0
    %903 = vmatprep.subr.mxu0 0.0
    %904 = vmatpush1.msra.mxu0 0.0
    %905 = vmatprep.subr.mxu0 0.0
    %906 = vmatpush1.msra.mxu0 0.0
    %907 = vmatprep.subr.mxu0 0.0
    %908 = vmatpush1.msra.mxu0 0.0
    %909 = vmatprep.subr.mxu0 0.0
    %910 = vmatpush1.msra.mxu0 0.0
    %911 = vmatprep.subr.mxu0 0.0
    %912 = vmatpush1.msra.mxu0 0.0
    %913 = vmatprep.subr.mxu0 0.0
    %914 = vmatpush1.msra.mxu0 0.0
    %915 = vmatprep.subr.mxu0 0.0
    %916 = vmatpush1.msra.mxu0 0.0
    %917 = vmatprep.subr.mxu0 0.0
    %918 = vmatpush1.msra.mxu0 0.0
    %919 = vmatprep.subr.mxu0 0.0
    %920 = vmatpush1.msra.mxu0 0.0
    %921 = vmatprep.subr.mxu0 0.0
    %922 = vmatpush1.msra.mxu0 0.0
    %923 = vmatprep.subr.mxu0 0.0
    %924 = vmatpush1.msra.mxu0 0.0
    %925 = vmatprep.subr.mxu0 0.0
    %926 = vmatpush1.msra.mxu0 0.0
    %927 = vmatprep.mubr.f32.mxu0 0.0
    %928 = vmatmul.mubr.f32.gmra.mrb[0].mxu0 %v861
    %v929 = vpop.f32.mrb[0].mxu0
    %v930 = vadd.f32 %v831, %v929
    %v931 = vpop.f32.mrb[0].mxu0
    %932 = vdwg.mxu0
    %v933 = vadd.f32 %v930, %v216
    %v934 = vxor.u32 %v933, 2147483648
    %v935 = vmul.f32 %v934, 1.442695
    %v936 = vpow.pop %v935
    %v937 = vadd.f32 %v936, 1.0
    %v938 = vrcp.pop %v937
    %v939 = vmul.f32 1.0, %v938
    %v940 = vtanh.pop %v933
    %v941 = vmul.f32 %v939, %v746
    %943 = vrot.lane.b32.xlu0 %v940, 64
    %v944 = vpop.permute.xlu0 %943
    %v946 = vmul.f32 %v939, %v944
    %948 = vrot.lane.b32.xlu0 %v946, 32
    %v949 = vpop.permute.xlu0 %948
    %v951 = vadd.f32 %v941, %v949
    %v952 = vtanh.pop %v951
    %954 = vrot.lane.b32.xlu0 %v952, 64
    %v955 = vpop.permute.xlu0 %954
    %v957 = vmul.f32 %v939, %v955
    %960 = vrot.lane.b32.xlu0 %v957, 64
    %v961 = vpop.permute.xlu0 %960
    %v963 = vsel %vm245, %v860, %v961
    %v965 = vsel %vm348, %v963, 0
    %967 = vmatprep.subr.mxu0 %v192
    %968 = vmatpush1.msra.mxu0 %v191
    %969 = vmatprep.subr.mxu0 %v194
    %970 = vmatpush1.msra.mxu0 %v193
    %971 = vmatprep.subr.mxu0 %v196
    %972 = vmatpush1.msra.mxu0 %v195
    %973 = vmatprep.subr.mxu0 %v198
    %974 = vmatpush1.msra.mxu0 %v197
    %975 = vmatprep.subr.mxu0 %v200
    %976 = vmatpush1.msra.mxu0 %v199
    %977 = vmatprep.subr.mxu0 %v202
    %978 = vmatpush1.msra.mxu0 %v201
    %979 = vmatprep.subr.mxu0 %v204
    %980 = vmatpush1.msra.mxu0 %v203
    %981 = vmatprep.subr.mxu0 %v206
    %982 = vmatpush1.msra.mxu0 %v205
    %983 = vmatprep.subr.mxu0 0.0
    %984 = vmatpush1.msra.mxu0 0.0
    %985 = vmatprep.subr.mxu0 0.0
    %986 = vmatpush1.msra.mxu0 0.0
    %987 = vmatprep.subr.mxu0 0.0
    %988 = vmatpush1.msra.mxu0 0.0
    %989 = vmatprep.subr.mxu0 0.0
    %990 = vmatpush1.msra.mxu0 0.0
    %991 = vmatprep.subr.mxu0 0.0
    %992 = vmatpush1.msra.mxu0 0.0
    %993 = vmatprep.subr.mxu0 0.0
    %994 = vmatpush1.msra.mxu0 0.0
    %995 = vmatprep.subr.mxu0 0.0
    %996 = vmatpush1.msra.mxu0 0.0
    %997 = vmatprep.subr.mxu0 0.0
    %998 = vmatpush1.msra.mxu0 0.0
    %999 = vmatprep.subr.mxu0 0.0
    %1000 = vmatpush1.msra.mxu0 0.0
    %1001 = vmatprep.subr.mxu0 0.0
    %1002 = vmatpush1.msra.mxu0 0.0
    %1003 = vmatprep.subr.mxu0 0.0
    %1004 = vmatpush1.msra.mxu0 0.0
    %1005 = vmatprep.subr.mxu0 0.0
    %1006 = vmatpush1.msra.mxu0 0.0
    %1007 = vmatprep.subr.mxu0 0.0
    %1008 = vmatpush1.msra.mxu0 0.0
    %1009 = vmatprep.subr.mxu0 0.0
    %1010 = vmatpush1.msra.mxu0 0.0
    %1011 = vmatprep.subr.mxu0 0.0
    %1012 = vmatpush1.msra.mxu0 0.0
    %1013 = vmatprep.subr.mxu0 0.0
    %1014 = vmatpush1.msra.mxu0 0.0
    %1015 = vmatprep.subr.mxu0 0.0
    %1016 = vmatpush1.msra.mxu0 0.0
    %1017 = vmatprep.subr.mxu0 0.0
    %1018 = vmatpush1.msra.mxu0 0.0
    %1019 = vmatprep.subr.mxu0 0.0
    %1020 = vmatpush1.msra.mxu0 0.0
    %1021 = vmatprep.subr.mxu0 0.0
    %1022 = vmatpush1.msra.mxu0 0.0
    %1023 = vmatprep.subr.mxu0 0.0
    %1024 = vmatpush1.msra.mxu0 0.0
    %1025 = vmatprep.subr.mxu0 0.0
    %1026 = vmatpush1.msra.mxu0 0.0
    %1027 = vmatprep.subr.mxu0 0.0
    %1028 = vmatpush1.msra.mxu0 0.0
    %1029 = vmatprep.subr.mxu0 0.0
    %1030 = vmatpush1.msra.mxu0 0.0
    %1031 = vmatprep.mubr.f32.mxu0 0.0
    %1032 = vmatmul.mubr.f32.gmra.mrb[0].mxu0 %v965
    %v1033 = vpop.f32.mrb[0].mxu0
    %v1034 = vadd.f32 0.0, %v1033
    %v1035 = vpop.f32.mrb[0].mxu0
    %v1036 = vadd.f32 0.0, %v1035
    %1037 = vdwg.mxu0
    %v1038 = vadd.f32 %v173, %v1034
    %v1039 = vxor.u32 %v1038, 2147483648
    %v1040 = vmul.f32 %v1039, 1.442695
    %v1041 = vpow.pop %v1040
    %v1042 = vadd.f32 %v1041, 1.0
    %v1043 = vrcp.pop %v1042
    %v1044 = vmul.f32 1.0, %v1043
    %v1045 = vtanh.pop %v1038
    %v1046 = vmul.f32 %v1044, %v851
    %1048 = vrot.lane.b32.xlu0 %v1045, 64
    %v1049 = vpop.permute.xlu0 %1048
    %v1051 = vmul.f32 %v1044, %v1049
    %1053 = vrot.lane.b32.xlu0 %v1051, 32
    %v1054 = vpop.permute.xlu0 %1053
    %v1056 = vadd.f32 %v1046, %v1054
    %v1057 = vtanh.pop %v1056
    %1059 = vrot.lane.b32.xlu0 %v1057, 64
    %v1060 = vpop.permute.xlu0 %1059
    %v1062 = vmul.f32 %v1044, %v1060
    %1064 = vrot.lane.b32.xlu0 %v1062, 32
    %v1065 = vpop.permute.xlu0 %1064
    %v1066 = vsel %vm245, %v1065, 0
    %1068 = vmatprep.subr.mxu0 0.0
    %1069 = vmatpush1.msra.mxu0 %v207
    %1070 = vmatprep.subr.mxu0 0.0
    %1071 = vmatpush1.msra.mxu0 %v208
    %1072 = vmatprep.subr.mxu0 0.0
    %1073 = vmatpush1.msra.mxu0 %v209
    %1074 = vmatprep.subr.mxu0 0.0
    %1075 = vmatpush1.msra.mxu0 %v210
    %1076 = vmatprep.subr.mxu0 0.0
    %1077 = vmatpush1.msra.mxu0 0.0
    %1078 = vmatprep.subr.mxu0 0.0
    %1079 = vmatpush1.msra.mxu0 0.0
    %1080 = vmatprep.subr.mxu0 0.0
    %1081 = vmatpush1.msra.mxu0 0.0
    %1082 = vmatprep.subr.mxu0 0.0
    %1083 = vmatpush1.msra.mxu0 0.0
    %1084 = vmatprep.subr.mxu0 0.0
    %1085 = vmatpush1.msra.mxu0 0.0
    %1086 = vmatprep.subr.mxu0 0.0
    %1087 = vmatpush1.msra.mxu0 0.0
    %1088 = vmatprep.subr.mxu0 0.0
    %1089 = vmatpush1.msra.mxu0 0.0
    %1090 = vmatprep.subr.mxu0 0.0
    %1091 = vmatpush1.msra.mxu0 0.0
    %1092 = vmatprep.subr.mxu0 0.0
    %1093 = vmatpush1.msra.mxu0 0.0
    %1094 = vmatprep.subr.mxu0 0.0
    %1095 = vmatpush1.msra.mxu0 0.0
    %1096 = vmatprep.subr.mxu0 0.0
    %1097 = vmatpush1.msra.mxu0 0.0
    %1098 = vmatprep.subr.mxu0 0.0
    %1099 = vmatpush1.msra.mxu0 0.0
    %1100 = vmatprep.subr.mxu0 0.0
    %1101 = vmatpush1.msra.mxu0 0.0
    %1102 = vmatprep.subr.mxu0 0.0
    %1103 = vmatpush1.msra.mxu0 0.0
    %1104 = vmatprep.subr.mxu0 0.0
    %1105 = vmatpush1.msra.mxu0 0.0
    %1106 = vmatprep.subr.mxu0 0.0
    %1107 = vmatpush1.msra.mxu0 0.0
    %1108 = vmatprep.subr.mxu0 0.0
    %1109 = vmatpush1.msra.mxu0 0.0
    %1110 = vmatprep.subr.mxu0 0.0
    %1111 = vmatpush1.msra.mxu0 0.0
    %1112 = vmatprep.subr.mxu0 0.0
    %1113 = vmatpush1.msra.mxu0 0.0
    %1114 = vmatprep.subr.mxu0 0.0
    %1115 = vmatpush1.msra.mxu0 0.0
    %1116 = vmatprep.subr.mxu0 0.0
    %1117 = vmatpush1.msra.mxu0 0.0
    %1118 = vmatprep.subr.mxu0 0.0
    %1119 = vmatpush1.msra.mxu0 0.0
    %1120 = vmatprep.subr.mxu0 0.0
    %1121 = vmatpush1.msra.mxu0 0.0
    %1122 = vmatprep.subr.mxu0 0.0
    %1123 = vmatpush1.msra.mxu0 0.0
    %1124 = vmatprep.subr.mxu0 0.0
    %1125 = vmatpush1.msra.mxu0 0.0
    %1126 = vmatprep.subr.mxu0 0.0
    %1127 = vmatpush1.msra.mxu0 0.0
    %1128 = vmatprep.subr.mxu0 0.0
    %1129 = vmatpush1.msra.mxu0 0.0
    %1130 = vmatprep.subr.mxu0 0.0
    %1131 = vmatpush1.msra.mxu0 0.0
    %1132 = vmatprep.mubr.f32.mxu0 0.0
    %1133 = vmatmul.mubr.f32.gmra.mrb[0].mxu0 %v1066
    %v1134 = vpop.f32.mrb[0].mxu0
    %v1135 = vadd.f32 %v1036, %v1134
    %v1136 = vpop.f32.mrb[0].mxu0
    %1137 = vdwg.mxu0
    %v1138 = vadd.f32 %v1135, %v216
    %v1139 = vxor.u32 %v1138, 2147483648
    %v1140 = vmul.f32 %v1139, 1.442695
    %v1141 = vpow.pop %v1140
    %v1142 = vadd.f32 %v1141, 1.0
    %v1143 = vrcp.pop %v1142
    %v1144 = vmul.f32 1.0, %v1143
    %v1145 = vtanh.pop %v1138
    %v1146 = vmul.f32 %v1144, %v951
    %1148 = vrot.lane.b32.xlu0 %v1145, 64
    %v1149 = vpop.permute.xlu0 %1148
    %v1151 = vmul.f32 %v1144, %v1149
    %1153 = vrot.lane.b32.xlu0 %v1151, 32
    %v1154 = vpop.permute.xlu0 %1153
    %v1156 = vadd.f32 %v1146, %v1154
    %v1157 = vtanh.pop %v1156
    %1159 = vrot.lane.b32.xlu0 %v1157, 64
    %v1160 = vpop.permute.xlu0 %1159
    %v1162 = vmul.f32 %v1144, %v1160
    %1165 = vrot.lane.b32.xlu0 %v1162, 64
    %v1166 = vpop.permute.xlu0 %1165
    %v1168 = vsel %vm245, %v1065, %v1166
    %v1170 = vsel %vm348, %v1168, 0
    %1172 = vmatprep.subr.mxu0 %v192
    %1173 = vmatpush1.msra.mxu0 %v191
    %1174 = vmatprep.subr.mxu0 %v194
    %1175 = vmatpush1.msra.mxu0 %v193
    %1176 = vmatprep.subr.mxu0 %v196
    %1177 = vmatpush1.msra.mxu0 %v195
    %1178 = vmatprep.subr.mxu0 %v198
    %1179 = vmatpush1.msra.mxu0 %v197
    %1180 = vmatprep.subr.mxu0 %v200
    %1181 = vmatpush1.msra.mxu0 %v199
    %1182 = vmatprep.subr.mxu0 %v202
    %1183 = vmatpush1.msra.mxu0 %v201
    %1184 = vmatprep.subr.mxu0 %v204
    %1185 = vmatpush1.msra.mxu0 %v203
    %1186 = vmatprep.subr.mxu0 %v206
    %1187 = vmatpush1.msra.mxu0 %v205
    %1188 = vmatprep.subr.mxu0 0.0
    %1189 = vmatpush1.msra.mxu0 0.0
    %1190 = vmatprep.subr.mxu0 0.0
    %1191 = vmatpush1.msra.mxu0 0.0
    %1192 = vmatprep.subr.mxu0 0.0
    %1193 = vmatpush1.msra.mxu0 0.0
    %1194 = vmatprep.subr.mxu0 0.0
    %1195 = vmatpush1.msra.mxu0 0.0
    %1196 = vmatprep.subr.mxu0 0.0
    %1197 = vmatpush1.msra.mxu0 0.0
    %1198 = vmatprep.subr.mxu0 0.0
    %1199 = vmatpush1.msra.mxu0 0.0
    %1200 = vmatprep.subr.mxu0 0.0
    %1201 = vmatpush1.msra.mxu0 0.0
    %1202 = vmatprep.subr.mxu0 0.0
    %1203 = vmatpush1.msra.mxu0 0.0
    %1204 = vmatprep.subr.mxu0 0.0
    %1205 = vmatpush1.msra.mxu0 0.0
    %1206 = vmatprep.subr.mxu0 0.0
    %1207 = vmatpush1.msra.mxu0 0.0
    %1208 = vmatprep.subr.mxu0 0.0
    %1209 = vmatpush1.msra.mxu0 0.0
    %1210 = vmatprep.subr.mxu0 0.0
    %1211 = vmatpush1.msra.mxu0 0.0
    %1212 = vmatprep.subr.mxu0 0.0
    %1213 = vmatpush1.msra.mxu0 0.0
    %1214 = vmatprep.subr.mxu0 0.0
    %1215 = vmatpush1.msra.mxu0 0.0
    %1216 = vmatprep.subr.mxu0 0.0
    %1217 = vmatpush1.msra.mxu0 0.0
    %1218 = vmatprep.subr.mxu0 0.0
    %1219 = vmatpush1.msra.mxu0 0.0
    %1220 = vmatprep.subr.mxu0 0.0
    %1221 = vmatpush1.msra.mxu0 0.0
    %1222 = vmatprep.subr.mxu0 0.0
    %1223 = vmatpush1.msra.mxu0 0.0
    %1224 = vmatprep.subr.mxu0 0.0
    %1225 = vmatpush1.msra.mxu0 0.0
    %1226 = vmatprep.subr.mxu0 0.0
    %1227 = vmatpush1.msra.mxu0 0.0
    %1228 = vmatprep.subr.mxu0 0.0
    %1229 = vmatpush1.msra.mxu0 0.0
    %1230 = vmatprep.subr.mxu0 0.0
    %1231 = vmatpush1.msra.mxu0 0.0
    %1232 = vmatprep.subr.mxu0 0.0
    %1233 = vmatpush1.msra.mxu0 0.0
    %1234 = vmatprep.subr.mxu0 0.0
    %1235 = vmatpush1.msra.mxu0 0.0
    %1236 = vmatprep.mubr.f32.mxu0 0.0
    %1237 = vmatmul.mubr.f32.gmra.mrb[0].mxu0 %v1170
    %v1238 = vpop.f32.mrb[0].mxu0
    %v1239 = vadd.f32 0.0, %v1238
    %v1240 = vpop.f32.mrb[0].mxu0
    %v1241 = vadd.f32 0.0, %v1240
    %1242 = vdwg.mxu0
    %v1243 = vadd.f32 %v178, %v1239
    %v1244 = vxor.u32 %v1243, 2147483648
    %v1245 = vmul.f32 %v1244, 1.442695
    %v1246 = vpow.pop %v1245
    %v1247 = vadd.f32 %v1246, 1.0
    %v1248 = vrcp.pop %v1247
    %v1249 = vmul.f32 1.0, %v1248
    %v1250 = vtanh.pop %v1243
    %v1251 = vmul.f32 %v1249, %v1056
    %1253 = vrot.lane.b32.xlu0 %v1250, 64
    %v1254 = vpop.permute.xlu0 %1253
    %v1256 = vmul.f32 %v1249, %v1254
    %1258 = vrot.lane.b32.xlu0 %v1256, 32
    %v1259 = vpop.permute.xlu0 %1258
    %v1261 = vadd.f32 %v1251, %v1259
    %v1262 = vtanh.pop %v1261
    %1264 = vrot.lane.b32.xlu0 %v1262, 64
    %v1265 = vpop.permute.xlu0 %1264
    %v1267 = vmul.f32 %v1249, %v1265
    %1269 = vrot.lane.b32.xlu0 %v1267, 32
    %v1270 = vpop.permute.xlu0 %1269
    %v1271 = vsel %vm245, %v1270, 0
    %1273 = vmatprep.subr.mxu0 0.0
    %1274 = vmatpush1.msra.mxu0 %v207
    %1275 = vmatprep.subr.mxu0 0.0
    %1276 = vmatpush1.msra.mxu0 %v208
    %1277 = vmatprep.subr.mxu0 0.0
    %1278 = vmatpush1.msra.mxu0 %v209
    %1279 = vmatprep.subr.mxu0 0.0
    %1280 = vmatpush1.msra.mxu0 %v210
    %1281 = vmatprep.subr.mxu0 0.0
    %1282 = vmatpush1.msra.mxu0 0.0
    %1283 = vmatprep.subr.mxu0 0.0
    %1284 = vmatpush1.msra.mxu0 0.0
    %1285 = vmatprep.subr.mxu0 0.0
    %1286 = vmatpush1.msra.mxu0 0.0
    %1287 = vmatprep.subr.mxu0 0.0
    %1288 = vmatpush1.msra.mxu0 0.0
    %1289 = vmatprep.subr.mxu0 0.0
    %1290 = vmatpush1.msra.mxu0 0.0
    %1291 = vmatprep.subr.mxu0 0.0
    %1292 = vmatpush1.msra.mxu0 0.0
    %1293 = vmatprep.subr.mxu0 0.0
    %1294 = vmatpush1.msra.mxu0 0.0
    %1295 = vmatprep.subr.mxu0 0.0
    %1296 = vmatpush1.msra.mxu0 0.0
    %1297 = vmatprep.subr.mxu0 0.0
    %1298 = vmatpush1.msra.mxu0 0.0
    %1299 = vmatprep.subr.mxu0 0.0
    %1300 = vmatpush1.msra.mxu0 0.0
    %1301 = vmatprep.subr.mxu0 0.0
    %1302 = vmatpush1.msra.mxu0 0.0
    %1303 = vmatprep.subr.mxu0 0.0
    %1304 = vmatpush1.msra.mxu0 0.0
    %1305 = vmatprep.subr.mxu0 0.0
    %1306 = vmatpush1.msra.mxu0 0.0
    %1307 = vmatprep.subr.mxu0 0.0
    %1308 = vmatpush1.msra.mxu0 0.0
    %1309 = vmatprep.subr.mxu0 0.0
    %1310 = vmatpush1.msra.mxu0 0.0
    %1311 = vmatprep.subr.mxu0 0.0
    %1312 = vmatpush1.msra.mxu0 0.0
    %1313 = vmatprep.subr.mxu0 0.0
    %1314 = vmatpush1.msra.mxu0 0.0
    %1315 = vmatprep.subr.mxu0 0.0
    %1316 = vmatpush1.msra.mxu0 0.0
    %1317 = vmatprep.subr.mxu0 0.0
    %1318 = vmatpush1.msra.mxu0 0.0
    %1319 = vmatprep.subr.mxu0 0.0
    %1320 = vmatpush1.msra.mxu0 0.0
    %1321 = vmatprep.subr.mxu0 0.0
    %1322 = vmatpush1.msra.mxu0 0.0
    %1323 = vmatprep.subr.mxu0 0.0
    %1324 = vmatpush1.msra.mxu0 0.0
    %1325 = vmatprep.subr.mxu0 0.0
    %1326 = vmatpush1.msra.mxu0 0.0
    %1327 = vmatprep.subr.mxu0 0.0
    %1328 = vmatpush1.msra.mxu0 0.0
    %1329 = vmatprep.subr.mxu0 0.0
    %1330 = vmatpush1.msra.mxu0 0.0
    %1331 = vmatprep.subr.mxu0 0.0
    %1332 = vmatpush1.msra.mxu0 0.0
    %1333 = vmatprep.subr.mxu0 0.0
    %1334 = vmatpush1.msra.mxu0 0.0
    %1335 = vmatprep.subr.mxu0 0.0
    %1336 = vmatpush1.msra.mxu0 0.0
    %1337 = vmatprep.mubr.f32.mxu0 0.0
    %1338 = vmatmul.mubr.f32.gmra.mrb[0].mxu0 %v1271
    %v1339 = vpop.f32.mrb[0].mxu0
    %v1340 = vadd.f32 %v1241, %v1339
    %v1341 = vpop.f32.mrb[0].mxu0
    %1342 = vdwg.mxu0
    %v1343 = vadd.f32 %v1340, %v216
    %v1344 = vxor.u32 %v1343, 2147483648
    %v1345 = vmul.f32 %v1344, 1.442695
    %v1346 = vpow.pop %v1345
    %v1347 = vadd.f32 %v1346, 1.0
    %v1348 = vrcp.pop %v1347
    %v1349 = vmul.f32 1.0, %v1348
    %v1350 = vtanh.pop %v1343
    %v1351 = vmul.f32 %v1349, %v1156
    %1353 = vrot.lane.b32.xlu0 %v1350, 64
    %v1354 = vpop.permute.xlu0 %1353
    %v1356 = vmul.f32 %v1349, %v1354
    %1358 = vrot.lane.b32.xlu0 %v1356, 32
    %v1359 = vpop.permute.xlu0 %1358
    %v1361 = vadd.f32 %v1351, %v1359
    %v1362 = vtanh.pop %v1361
    %1364 = vrot.lane.b32.xlu0 %v1362, 64
    %v1365 = vpop.permute.xlu0 %1364
    %v1367 = vmul.f32 %v1349, %v1365
    %1370 = vrot.lane.b32.xlu0 %v1367, 64
    %v1371 = vpop.permute.xlu0 %1370
    %v1373 = vsel %vm245, %v1270, %v1371
    %v1375 = vsel %vm348, %v1373, 0
    %1377 = vmatprep.subr.mxu0 %v192
    %1378 = vmatpush1.msra.mxu0 %v191
    %1379 = vmatprep.subr.mxu0 %v194
    %1380 = vmatpush1.msra.mxu0 %v193
    %1381 = vmatprep.subr.mxu0 %v196
    %1382 = vmatpush1.msra.mxu0 %v195
    %1383 = vmatprep.subr.mxu0 %v198
    %1384 = vmatpush1.msra.mxu0 %v197
    %1385 = vmatprep.subr.mxu0 %v200
    %1386 = vmatpush1.msra.mxu0 %v199
    %1387 = vmatprep.subr.mxu0 %v202
    %1388 = vmatpush1.msra.mxu0 %v201
    %1389 = vmatprep.subr.mxu0 %v204
    %1390 = vmatpush1.msra.mxu0 %v203
    %1391 = vmatprep.subr.mxu0 %v206
    %1392 = vmatpush1.msra.mxu0 %v205
    %1393 = vmatprep.subr.mxu0 0.0
    %1394 = vmatpush1.msra.mxu0 0.0
    %1395 = vmatprep.subr.mxu0 0.0
    %1396 = vmatpush1.msra.mxu0 0.0
    %1397 = vmatprep.subr.mxu0 0.0
    %1398 = vmatpush1.msra.mxu0 0.0
    %1399 = vmatprep.subr.mxu0 0.0
    %1400 = vmatpush1.msra.mxu0 0.0
    %1401 = vmatprep.subr.mxu0 0.0
    %1402 = vmatpush1.msra.mxu0 0.0
    %1403 = vmatprep.subr.mxu0 0.0
    %1404 = vmatpush1.msra.mxu0 0.0
    %1405 = vmatprep.subr.mxu0 0.0
    %1406 = vmatpush1.msra.mxu0 0.0
    %1407 = vmatprep.subr.mxu0 0.0
    %1408 = vmatpush1.msra.mxu0 0.0
    %1409 = vmatprep.subr.mxu0 0.0
    %1410 = vmatpush1.msra.mxu0 0.0
    %1411 = vmatprep.subr.mxu0 0.0
    %1412 = vmatpush1.msra.mxu0 0.0
    %1413 = vmatprep.subr.mxu0 0.0
    %1414 = vmatpush1.msra.mxu0 0.0
    %1415 = vmatprep.subr.mxu0 0.0
    %1416 = vmatpush1.msra.mxu0 0.0
    %1417 = vmatprep.subr.mxu0 0.0
    %1418 = vmatpush1.msra.mxu0 0.0
    %1419 = vmatprep.subr.mxu0 0.0
    %1420 = vmatpush1.msra.mxu0 0.0
    %1421 = vmatprep.subr.mxu0 0.0
    %1422 = vmatpush1.msra.mxu0 0.0
    %1423 = vmatprep.subr.mxu0 0.0
    %1424 = vmatpush1.msra.mxu0 0.0
    %1425 = vmatprep.subr.mxu0 0.0
    %1426 = vmatpush1.msra.mxu0 0.0
    %1427 = vmatprep.subr.mxu0 0.0
    %1428 = vmatpush1.msra.mxu0 0.0
    %1429 = vmatprep.subr.mxu0 0.0
    %1430 = vmatpush1.msra.mxu0 0.0
    %1431 = vmatprep.subr.mxu0 0.0
    %1432 = vmatpush1.msra.mxu0 0.0
    %1433 = vmatprep.subr.mxu0 0.0
    %1434 = vmatpush1.msra.mxu0 0.0
    %1435 = vmatprep.subr.mxu0 0.0
    %1436 = vmatpush1.msra.mxu0 0.0
    %1437 = vmatprep.subr.mxu0 0.0
    %1438 = vmatpush1.msra.mxu0 0.0
    %1439 = vmatprep.subr.mxu0 0.0
    %1440 = vmatpush1.msra.mxu0 0.0
    %1441 = vmatprep.mubr.f32.mxu0 0.0
    %1442 = vmatmul.mubr.f32.gmra.mrb[0].mxu0 %v1375
    %v1443 = vpop.f32.mrb[0].mxu0
    %v1444 = vadd.f32 0.0, %v1443
    %v1445 = vpop.f32.mrb[0].mxu0
    %v1446 = vadd.f32 0.0, %v1445
    %1447 = vdwg.mxu0
    %v1448 = vadd.f32 %v183, %v1444
    %v1449 = vxor.u32 %v1448, 2147483648
    %v1450 = vmul.f32 %v1449, 1.442695
    %v1451 = vpow.pop %v1450
    %v1452 = vadd.f32 %v1451, 1.0
    %v1453 = vrcp.pop %v1452
    %v1454 = vmul.f32 1.0, %v1453
    %v1455 = vtanh.pop %v1448
    %v1456 = vmul.f32 %v1454, %v1261
    %1458 = vrot.lane.b32.xlu0 %v1455, 64
    %v1459 = vpop.permute.xlu0 %1458
    %v1461 = vmul.f32 %v1454, %v1459
    %1463 = vrot.lane.b32.xlu0 %v1461, 32
    %v1464 = vpop.permute.xlu0 %1463
    %v1466 = vadd.f32 %v1456, %v1464
    %v1467 = vtanh.pop %v1466
    %1469 = vrot.lane.b32.xlu0 %v1467, 64
    %v1470 = vpop.permute.xlu0 %1469
    %v1472 = vmul.f32 %v1454, %v1470
    %1474 = vrot.lane.b32.xlu0 %v1472, 32
    %v1475 = vpop.permute.xlu0 %1474
    %v1476 = vsel %vm245, %v1475, 0
    %1478 = vmatprep.subr.mxu0 0.0
    %1479 = vmatpush1.msra.mxu0 %v207
    %1480 = vmatprep.subr.mxu0 0.0
    %1481 = vmatpush1.msra.mxu0 %v208
    %1482 = vmatprep.subr.mxu0 0.0
    %1483 = vmatpush1.msra.mxu0 %v209
    %1484 = vmatprep.subr.mxu0 0.0
    %1485 = vmatpush1.msra.mxu0 %v210
    %1486 = vmatprep.subr.mxu0 0.0
    %1487 = vmatpush1.msra.mxu0 0.0
    %1488 = vmatprep.subr.mxu0 0.0
    %1489 = vmatpush1.msra.mxu0 0.0
    %1490 = vmatprep.subr.mxu0 0.0
    %1491 = vmatpush1.msra.mxu0 0.0
    %1492 = vmatprep.subr.mxu0 0.0
    %1493 = vmatpush1.msra.mxu0 0.0
    %1494 = vmatprep.subr.mxu0 0.0
    %1495 = vmatpush1.msra.mxu0 0.0
    %1496 = vmatprep.subr.mxu0 0.0
    %1497 = vmatpush1.msra.mxu0 0.0
    %1498 = vmatprep.subr.mxu0 0.0
    %1499 = vmatpush1.msra.mxu0 0.0
    %1500 = vmatprep.subr.mxu0 0.0
    %1501 = vmatpush1.msra.mxu0 0.0
    %1502 = vmatprep.subr.mxu0 0.0
    %1503 = vmatpush1.msra.mxu0 0.0
    %1504 = vmatprep.subr.mxu0 0.0
    %1505 = vmatpush1.msra.mxu0 0.0
    %1506 = vmatprep.subr.mxu0 0.0
    %1507 = vmatpush1.msra.mxu0 0.0
    %1508 = vmatprep.subr.mxu0 0.0
    %1509 = vmatpush1.msra.mxu0 0.0
    %1510 = vmatprep.subr.mxu0 0.0
    %1511 = vmatpush1.msra.mxu0 0.0
    %1512 = vmatprep.subr.mxu0 0.0
    %1513 = vmatpush1.msra.mxu0 0.0
    %1514 = vmatprep.subr.mxu0 0.0
    %1515 = vmatpush1.msra.mxu0 0.0
    %1516 = vmatprep.subr.mxu0 0.0
    %1517 = vmatpush1.msra.mxu0 0.0
    %1518 = vmatprep.subr.mxu0 0.0
    %1519 = vmatpush1.msra.mxu0 0.0
    %1520 = vmatprep.subr.mxu0 0.0
    %1521 = vmatpush1.msra.mxu0 0.0
    %1522 = vmatprep.subr.mxu0 0.0
    %1523 = vmatpush1.msra.mxu0 0.0
    %1524 = vmatprep.subr.mxu0 0.0
    %1525 = vmatpush1.msra.mxu0 0.0
    %1526 = vmatprep.subr.mxu0 0.0
    %1527 = vmatpush1.msra.mxu0 0.0
    %1528 = vmatprep.subr.mxu0 0.0
    %1529 = vmatpush1.msra.mxu0 0.0
    %1530 = vmatprep.subr.mxu0 0.0
    %1531 = vmatpush1.msra.mxu0 0.0
    %1532 = vmatprep.subr.mxu0 0.0
    %1533 = vmatpush1.msra.mxu0 0.0
    %1534 = vmatprep.subr.mxu0 0.0
    %1535 = vmatpush1.msra.mxu0 0.0
    %1536 = vmatprep.subr.mxu0 0.0
    %1537 = vmatpush1.msra.mxu0 0.0
    %1538 = vmatprep.subr.mxu0 0.0
    %1539 = vmatpush1.msra.mxu0 0.0
    %1540 = vmatprep.subr.mxu0 0.0
    %1541 = vmatpush1.msra.mxu0 0.0
    %1542 = vmatprep.mubr.f32.mxu0 0.0
    %1543 = vmatmul.mubr.f32.gmra.mrb[0].mxu0 %v1476
    %v1544 = vpop.f32.mrb[0].mxu0
    %v1545 = vadd.f32 %v1446, %v1544
    %v1546 = vpop.f32.mrb[0].mxu0
    %1547 = vdwg.mxu0
    %v1548 = vadd.f32 %v1545, %v216
    %v1549 = vxor.u32 %v1548, 2147483648
    %v1550 = vmul.f32 %v1549, 1.442695
    %v1551 = vpow.pop %v1550
    %v1552 = vadd.f32 %v1551, 1.0
    %v1553 = vrcp.pop %v1552
    %v1554 = vmul.f32 1.0, %v1553
    %v1555 = vtanh.pop %v1548
    %v1556 = vmul.f32 %v1554, %v1361
    %1558 = vrot.lane.b32.xlu0 %v1555, 64
    %v1559 = vpop.permute.xlu0 %1558
    %v1561 = vmul.f32 %v1554, %v1559
    %1563 = vrot.lane.b32.xlu0 %v1561, 32
    %v1564 = vpop.permute.xlu0 %1563
    %v1566 = vadd.f32 %v1556, %v1564
    %v1567 = vtanh.pop %v1566
    %1569 = vrot.lane.b32.xlu0 %v1567, 64
    %v1570 = vpop.permute.xlu0 %1569
    %v1572 = vmul.f32 %v1554, %v1570
    %1575 = vrot.lane.b32.xlu0 %v1572, 64
    %v1576 = vpop.permute.xlu0 %1575
    %v1578 = vsel %vm245, %v1475, %v1576
    %v1580 = vsel %vm348, %v1578, 0
    %1582 = vmatprep.subr.mxu0 %v192
    %1583 = vmatpush1.msra.mxu0 %v191
    %1584 = vmatprep.subr.mxu0 %v194
    %1585 = vmatpush1.msra.mxu0 %v193
    %1586 = vmatprep.subr.mxu0 %v196
    %1587 = vmatpush1.msra.mxu0 %v195
    %1588 = vmatprep.subr.mxu0 %v198
    %1589 = vmatpush1.msra.mxu0 %v197
    %1590 = vmatprep.subr.mxu0 %v200
    %1591 = vmatpush1.msra.mxu0 %v199
    %1592 = vmatprep.subr.mxu0 %v202
    %1593 = vmatpush1.msra.mxu0 %v201
    %1594 = vmatprep.subr.mxu0 %v204
    %1595 = vmatpush1.msra.mxu0 %v203
    %1596 = vmatprep.subr.mxu0 %v206
    %1597 = vmatpush1.msra.mxu0 %v205
    %1598 = vmatprep.subr.mxu0 0.0
    %1599 = vmatpush1.msra.mxu0 0.0
    %1600 = vmatprep.subr.mxu0 0.0
    %1601 = vmatpush1.msra.mxu0 0.0
    %1602 = vmatprep.subr.mxu0 0.0
    %1603 = vmatpush1.msra.mxu0 0.0
    %1604 = vmatprep.subr.mxu0 0.0
    %1605 = vmatpush1.msra.mxu0 0.0
    %1606 = vmatprep.subr.mxu0 0.0
    %1607 = vmatpush1.msra.mxu0 0.0
    %1608 = vmatprep.subr.mxu0 0.0
    %1609 = vmatpush1.msra.mxu0 0.0
    %1610 = vmatprep.subr.mxu0 0.0
    %1611 = vmatpush1.msra.mxu0 0.0
    %1612 = vmatprep.subr.mxu0 0.0
    %1613 = vmatpush1.msra.mxu0 0.0
    %1614 = vmatprep.subr.mxu0 0.0
    %1615 = vmatpush1.msra.mxu0 0.0
    %1616 = vmatprep.subr.mxu0 0.0
    %1617 = vmatpush1.msra.mxu0 0.0
    %1618 = vmatprep.subr.mxu0 0.0
    %1619 = vmatpush1.msra.mxu0 0.0
    %1620 = vmatprep.subr.mxu0 0.0
    %1621 = vmatpush1.msra.mxu0 0.0
    %1622 = vmatprep.subr.mxu0 0.0
    %1623 = vmatpush1.msra.mxu0 0.0
    %1624 = vmatprep.subr.mxu0 0.0
    %1625 = vmatpush1.msra.mxu0 0.0
    %1626 = vmatprep.subr.mxu0 0.0
    %1627 = vmatpush1.msra.mxu0 0.0
    %1628 = vmatprep.subr.mxu0 0.0
    %1629 = vmatpush1.msra.mxu0 0.0
    %1630 = vmatprep.subr.mxu0 0.0
    %1631 = vmatpush1.msra.mxu0 0.0
    %1632 = vmatprep.subr.mxu0 0.0
    %1633 = vmatpush1.msra.mxu0 0.0
    %1634 = vmatprep.subr.mxu0 0.0
    %1635 = vmatpush1.msra.mxu0 0.0
    %1636 = vmatprep.subr.mxu0 0.0
    %1637 = vmatpush1.msra.mxu0 0.0
    %1638 = vmatprep.subr.mxu0 0.0
    %1639 = vmatpush1.msra.mxu0 0.0
    %1640 = vmatprep.subr.mxu0 0.0
    %1641 = vmatpush1.msra.mxu0 0.0
    %1642 = vmatprep.subr.mxu0 0.0
    %1643 = vmatpush1.msra.mxu0 0.0
    %1644 = vmatprep.subr.mxu0 0.0
    %1645 = vmatpush1.msra.mxu0 0.0
    %1646 = vmatprep.mubr.f32.mxu0 0.0
    %1647 = vmatmul.mubr.f32.gmra.mrb[0].mxu0 %v1580
    %v1648 = vpop.f32.mrb[0].mxu0
    %v1649 = vadd.f32 0.0, %v1648
    %v1650 = vpop.f32.mrb[0].mxu0
    %v1651 = vadd.f32 0.0, %v1650
    %1652 = vdwg.mxu0
    %v1653 = vadd.f32 %v188, %v1649
    %v1654 = vxor.u32 %v1653, 2147483648
    %v1655 = vmul.f32 %v1654, 1.442695
    %v1656 = vpow.pop %v1655
    %v1657 = vadd.f32 %v1656, 1.0
    %v1658 = vrcp.pop %v1657
    %v1659 = vmul.f32 1.0, %v1658
    %v1660 = vtanh.pop %v1653
    %v1661 = vmul.f32 %v1659, %v1466
    %1663 = vrot.lane.b32.xlu0 %v1660, 64
    %v1664 = vpop.permute.xlu0 %1663
    %v1666 = vmul.f32 %v1659, %v1664
    %1668 = vrot.lane.b32.xlu0 %v1666, 32
    %v1669 = vpop.permute.xlu0 %1668
    %v1671 = vadd.f32 %v1661, %v1669
    %v1672 = vtanh.pop %v1671
    %1674 = vrot.lane.b32.xlu0 %v1672, 64
    %v1675 = vpop.permute.xlu0 %1674
    %v1677 = vmul.f32 %v1659, %v1675
    %1679 = vrot.lane.b32.xlu0 %v1677, 32
    %v1680 = vpop.permute.xlu0 %1679
    %v1681 = vsel %vm245, %v1680, 0
    %1683 = vmatprep.subr.mxu0 0.0
    %1684 = vmatpush1.msra.mxu0 %v207
    %1685 = vmatprep.subr.mxu0 0.0
    %1686 = vmatpush1.msra.mxu0 %v208
    %1687 = vmatprep.subr.mxu0 0.0
    %1688 = vmatpush1.msra.mxu0 %v209
    %1689 = vmatprep.subr.mxu0 0.0
    %1690 = vmatpush1.msra.mxu0 %v210
    %1691 = vmatprep.subr.mxu0 0.0
    %1692 = vmatpush1.msra.mxu0 0.0
    %1693 = vmatprep.subr.mxu0 0.0
    %1694 = vmatpush1.msra.mxu0 0.0
    %1695 = vmatprep.subr.mxu0 0.0
    %1696 = vmatpush1.msra.mxu0 0.0
    %1697 = vmatprep.subr.mxu0 0.0
    %1698 = vmatpush1.msra.mxu0 0.0
    %1699 = vmatprep.subr.mxu0 0.0
    %1700 = vmatpush1.msra.mxu0 0.0
    %1701 = vmatprep.subr.mxu0 0.0
    %1702 = vmatpush1.msra.mxu0 0.0
    %1703 = vmatprep.subr.mxu0 0.0
    %1704 = vmatpush1.msra.mxu0 0.0
    %1705 = vmatprep.subr.mxu0 0.0
    %1706 = vmatpush1.msra.mxu0 0.0
    %1707 = vmatprep.subr.mxu0 0.0
    %1708 = vmatpush1.msra.mxu0 0.0
    %1709 = vmatprep.subr.mxu0 0.0
    %1710 = vmatpush1.msra.mxu0 0.0
    %1711 = vmatprep.subr.mxu0 0.0
    %1712 = vmatpush1.msra.mxu0 0.0
    %1713 = vmatprep.subr.mxu0 0.0
    %1714 = vmatpush1.msra.mxu0 0.0
    %1715 = vmatprep.subr.mxu0 0.0
    %1716 = vmatpush1.msra.mxu0 0.0
    %1717 = vmatprep.subr.mxu0 0.0
    %1718 = vmatpush1.msra.mxu0 0.0
    %1719 = vmatprep.subr.mxu0 0.0
    %1720 = vmatpush1.msra.mxu0 0.0
    %1721 = vmatprep.subr.mxu0 0.0
    %1722 = vmatpush1.msra.mxu0 0.0
    %1723 = vmatprep.subr.mxu0 0.0
    %1724 = vmatpush1.msra.mxu0 0.0
    %1725 = vmatprep.subr.mxu0 0.0
    %1726 = vmatpush1.msra.mxu0 0.0
    %1727 = vmatprep.subr.mxu0 0.0
    %1728 = vmatpush1.msra.mxu0 0.0
    %1729 = vmatprep.subr.mxu0 0.0
    %1730 = vmatpush1.msra.mxu0 0.0
    %1731 = vmatprep.subr.mxu0 0.0
    %1732 = vmatpush1.msra.mxu0 0.0
    %1733 = vmatprep.subr.mxu0 0.0
    %1734 = vmatpush1.msra.mxu0 0.0
    %1735 = vmatprep.subr.mxu0 0.0
    %1736 = vmatpush1.msra.mxu0 0.0
    %1737 = vmatprep.subr.mxu0 0.0
    %1738 = vmatpush1.msra.mxu0 0.0
    %1739 = vmatprep.subr.mxu0 0.0
    %1740 = vmatpush1.msra.mxu0 0.0
    %1741 = vmatprep.subr.mxu0 0.0
    %1742 = vmatpush1.msra.mxu0 0.0
    %1743 = vmatprep.subr.mxu0 0.0
    %1744 = vmatpush1.msra.mxu0 0.0
    %1745 = vmatprep.subr.mxu0 0.0
    %1746 = vmatpush1.msra.mxu0 0.0
    %1747 = vmatprep.mubr.f32.mxu0 0.0
    %1748 = vmatmul.mubr.f32.gmra.mrb[0].mxu0 %v1681
    %v1749 = vpop.f32.mrb[0].mxu0
    %v1750 = vadd.f32 %v1651, %v1749
    %v1751 = vpop.f32.mrb[0].mxu0
    %1752 = vdwg.mxu0
    %v1753 = vadd.f32 %v1750, %v216
    %v1754 = vxor.u32 %v1753, 2147483648
    %v1755 = vmul.f32 %v1754, 1.442695
    %v1756 = vpow.pop %v1755
    %v1757 = vadd.f32 %v1756, 1.0
    %v1758 = vrcp.pop %v1757
    %v1759 = vmul.f32 1.0, %v1758
    %v1760 = vtanh.pop %v1753
    %v1761 = vmul.f32 %v1759, %v1566
    %1763 = vrot.lane.b32.xlu0 %v1760, 64
    %v1764 = vpop.permute.xlu0 %1763
    %v1766 = vmul.f32 %v1759, %v1764
    %1768 = vrot.lane.b32.xlu0 %v1766, 32
    %v1769 = vpop.permute.xlu0 %1768
    %v1771 = vadd.f32 %v1761, %v1769
    %v1772 = vtanh.pop %v1771
    %1774 = vrot.lane.b32.xlu0 %v1772, 64
    %v1775 = vpop.permute.xlu0 %1774
    %v1777 = vmul.f32 %v1759, %v1775
    %v1778 = vld [vmem:[%s6] sm:$0xff]
    %v1779 = vld [vmem:[%s6 + $0x8] sm:$0xff]
    %v1780 = vld [vmem:[%s6 + $0x10] sm:$0xff]
    %v1781 = vld [vmem:[%s6 + $0x18] sm:$0xff]
    %v1782 = vld [vmem:[%s7] sm:$0x1]
    %v1784 = vlaneseq
    %v1785 = vshrl.u32 %v1784, 7
    %v1786 = vsub.s32 0, %v1785
    %v1787 = vrot.slane %v1782, %v1786
    %1790 = vrot.lane.b32.xlu0 %v1777, 32
    %v1791 = vpop.permute.xlu0 %1790
    %v1792 = vsel %vm245, %v1791, 0
    %1794 = vmatprep.subr.mxu0 0.0
    %1795 = vmatpush1.msra.mxu0 %v1778
    %1796 = vmatprep.subr.mxu0 0.0
    %1797 = vmatpush1.msra.mxu0 %v1779
    %1798 = vmatprep.subr.mxu0 0.0
    %1799 = vmatpush1.msra.mxu0 %v1780
    %1800 = vmatprep.subr.mxu0 0.0
    %1801 = vmatpush1.msra.mxu0 %v1781
    %1802 = vmatprep.subr.mxu0 0.0
    %1803 = vmatpush1.msra.mxu0 0.0
    %1804 = vmatprep.subr.mxu0 0.0
    %1805 = vmatpush1.msra.mxu0 0.0
    %1806 = vmatprep.subr.mxu0 0.0
    %1807 = vmatpush1.msra.mxu0 0.0
    %1808 = vmatprep.subr.mxu0 0.0
    %1809 = vmatpush1.msra.mxu0 0.0
    %1810 = vmatprep.subr.mxu0 0.0
    %1811 = vmatpush1.msra.mxu0 0.0
    %1812 = vmatprep.subr.mxu0 0.0
    %1813 = vmatpush1.msra.mxu0 0.0
    %1814 = vmatprep.subr.mxu0 0.0
    %1815 = vmatpush1.msra.mxu0 0.0
    %1816 = vmatprep.subr.mxu0 0.0
    %1817 = vmatpush1.msra.mxu0 0.0
    %1818 = vmatprep.subr.mxu0 0.0
    %1819 = vmatpush1.msra.mxu0 0.0
    %1820 = vmatprep.subr.mxu0 0.0
    %1821 = vmatpush1.msra.mxu0 0.0
    %1822 = vmatprep.subr.mxu0 0.0
    %1823 = vmatpush1.msra.mxu0 0.0
    %1824 = vmatprep.subr.mxu0 0.0
    %1825 = vmatpush1.msra.mxu0 0.0
    %1826 = vmatprep.subr.mxu0 0.0
    %1827 = vmatpush1.msra.mxu0 0.0
    %1828 = vmatprep.subr.mxu0 0.0
    %1829 = vmatpush1.msra.mxu0 0.0
    %1830 = vmatprep.subr.mxu0 0.0
    %1831 = vmatpush1.msra.mxu0 0.0
    %1832 = vmatprep.subr.mxu0 0.0
    %1833 = vmatpush1.msra.mxu0 0.0
    %1834 = vmatprep.subr.mxu0 0.0
    %1835 = vmatpush1.msra.mxu0 0.0
    %1836 = vmatprep.subr.mxu0 0.0
    %1837 = vmatpush1.msra.mxu0 0.0
    %1838 = vmatprep.subr.mxu0 0.0
    %1839 = vmatpush1.msra.mxu0 0.0
    %1840 = vmatprep.subr.mxu0 0.0
    %1841 = vmatpush1.msra.mxu0 0.0
    %1842 = vmatprep.subr.mxu0 0.0
    %1843 = vmatpush1.msra.mxu0 0.0
    %1844 = vmatprep.subr.mxu0 0.0
    %1845 = vmatpush1.msra.mxu0 0.0
    %1846 = vmatprep.subr.mxu0 0.0
    %1847 = vmatpush1.msra.mxu0 0.0
    %1848 = vmatprep.subr.mxu0 0.0
    %1849 = vmatpush1.msra.mxu0 0.0
    %1850 = vmatprep.subr.mxu0 0.0
    %1851 = vmatpush1.msra.mxu0 0.0
    %1852 = vmatprep.subr.mxu0 0.0
    %1853 = vmatpush1.msra.mxu0 0.0
    %1854 = vmatprep.subr.mxu0 0.0
    %1855 = vmatpush1.msra.mxu0 0.0
    %1856 = vmatprep.subr.mxu0 0.0
    %1857 = vmatpush1.msra.mxu0 0.0
    %1858 = vmatprep.mubr.f32.mxu0 0.0
    %1859 = vmatmul.mubr.f32.gmra.mrb[0].mxu0 %v1792
    %v1860 = vpop.f32.mrb[0].mxu0
    %v1861 = vadd.f32 %v1787, %v1860
    %v1862 = vpop.f32.mrb[0].mxu0
    %1863 = vdwg.mxu0
    %1864 = vst [vmem:[#allocation5] sm:$0xff] %v1861
    // Predicated region
    $region38: #{tpu_custom_call.1} parent=1 // pred_check
      _
    $region39: #{tpu_custom_call.1} parent=1 // pred_check_branch
      %1866 = sbr.rel (0) target = $region41
    $region40: #{tpu_custom_call.1} parent=1 // pred_region
      %s1868 = ssub.s32 128, 128
      %1869 = vsyncadd [#allocation4], %s1868
      %s1871 = sshll.u32 [#allocation5], 4
      %s1872 = int_to_ptr.vmem [resolvable:$true] %s1871
      %1874 = dma.vmem_to_hbm [thread:$0]  %s1872, 128, %s8, [#allocation4]
    $region41: #{tpu_custom_call.1} parent=1 // pred_fallthru
      _
    // Predicated region
    $region42: #{tpu_custom_call.1} parent=1 // pred_check
      _
    $region43: #{tpu_custom_call.1} parent=1 // pred_check_branch
      %1876 = sbr.rel (0) target = $region45
    $region44: #{tpu_custom_call.1} parent=1 // pred_region
      %1877 = dma.done [#allocation4], 128
    $region45: #{tpu_custom_call.1} parent=1 // pred_fallthru
      _
    %1878 = vsyncpa [#allocation3], 1
    %1879 = vsyncpa [#allocation4], 1

</llo_original>
